<compile_context>
chip_gen: v7x
topology: tpu7x:2x2x1
jax: 0.10.0
libtpu: 0.0.40
codegen_flags: <defaults>
</compile_context>

<pallas_src>
import functools

import numpy as np
import jax
import jax.numpy as jnp
from jax.experimental import pallas as pl
from jax.experimental.pallas import tpu as pltpu

EPS = 1e-5  # torch.nn.InstanceNorm1d default


# ------------------------------ Pallas kernel --------------------------------
def dynamic_expert_kernel(x_ref, w1_ref, b1_ref, w2m_ref, seg_ref, *out_refs,
                          e_pad, hidden_per_expert):
    f32 = jnp.float32
    tb = x_ref.shape[0]
    x = x_ref[...]
    seg = seg_ref[...]                       # (EH_pad, E_pad) 0/1 expert selector

    # --- fused gate + fc1: a single MXU pass over x (opt 1) -------------------
    y = jnp.dot(x, w1_ref[...], preferred_element_type=f32) + b1_ref[...]
    g = y[:, :e_pad]                         # gate logits (raw; no softmax in forward)
    h = y[:, e_pad:]                         # packed fc1 activations, (tb, EH_pad)

    # --- per-(row, expert) InstanceNorm1d statistics (opt 2) ------------------
    # One segment matmul yields both mean and E[h^2] (h, h*h stacked on the
    # sublane axis); var = E[h^2] - mean^2 clamped at 0 (cancellation guard).
    inv_h = 1.0 / float(hidden_per_expert)
    stats = jnp.dot(jnp.concatenate([h, h * h], axis=0), seg,
                    preferred_element_type=f32) * inv_h           # (2*tb, E_pad)
    mean = stats[:tb]
    var = jnp.maximum(stats[tb:] - mean * mean, 0.0)
    inv_std = jax.lax.rsqrt(var + EPS)

    # One broadcast matmul expands mean / inv_std / gate to the EH_pad lanes.
    bc = jax.lax.dot_general(jnp.concatenate([mean, inv_std, g], axis=0), seg,
                             (((1,), (1,)), ((), ())),
                             preferred_element_type=f32)           # (3*tb, EH_pad)
    a = jnp.maximum((h - bc[:tb]) * bc[tb:2 * tb], 0.0)            # ReLU(InstanceNorm)

    # --- fused fc2∘mapper + gate mixture + bias (+ gate passthrough) (opt 3/4)
    #   lanes [0 : EH_pad]           -> a * bcast(gate)   (hits the w2m rows)
    #   lanes [EH_pad : EH_pad+E_pad]-> gate              (hits the b2m rows and,
    #       when the gate is packed into the output pad lanes, the offline
    #       identity columns that copy it to output lanes [C : C+E] for free)
    lhs = jnp.concatenate([a * bc[2 * tb:], g], axis=1)
    mixed = jnp.dot(lhs.astype(w2m_ref.dtype), w2m_ref[...],
                    preferred_element_type=f32)                    # (tb, C_pad)

    if len(out_refs) == 1:                   # gate packed into mixed's pad lanes
        out_refs[0][...] = mixed.astype(out_refs[0].dtype)
    else:                                    # fallback: separate gate output
        out_ref, gate_ref = out_refs
        out_ref[...] = mixed.astype(out_ref.dtype)
        gate_ref[...] = g.astype(gate_ref.dtype)
    # TODO(synk): per-expert `original_expert_outputs` (detach-only training
    # artifact) are not materialized by the fused kernel; use the reference
    # path if they are actually needed.


# ------------------------------- wrapper --------------------------------------
def _round_up(n, m):
    return ((n + m - 1) // m) * m


def _pick_tb(batch, *, num_parallel_blocks=2, cap=512):
    """Batch tile: sublane-aligned (multiple of 8), >= `num_parallel_blocks`
    grid steps whenever the batch allows it (v7x has 2 TensorCores and the
    batch axis is marked "parallel"), capped at `cap` rows so per-step VMEM
    stays tiny while the ~0.35-0.6 us per-grid-step overhead is amortized on
    the single-TC v5e/v6e serial grid."""
    if batch <= 8 * num_parallel_blocks:
        return 8
    per_block = _round_up(-(-batch // num_parallel_blocks), 8)
    return min(cap, per_block)


def pack_dynamic_expert_params(wg, bg, expert_params, *, lane=128,
                               matmul_dtype=None, pack_gate=True):
    """Offline packing / fusion of the DynamicExpert parameters.

    expert_params: list over experts of (w1 (Din,H), b1 (1,H), w2 (H,O),
    b2 (1,O), wm (O,C)) -- all in (in, out) layout.  All experts share H
    (class_per_task constant) and map to the same C (after expand_gmm).

    matmul_dtype: optionally cast the two big matmul weights to bf16
    (accumulation stays f32).  NOTE: this also degrades the gate logits since
    gate and fc1 share one fused matmul -- keep None if exact gates matter.
    """
    E = len(expert_params)
    Din, H = expert_params[0][0].shape
    C = expert_params[0][4].shape[1]
    EH = E * H
    E_pad = _round_up(E, lane)
    EH_pad = _round_up(EH, lane)
    C_pad = _round_up(C, lane)
    # Gate can ride in the output pad lanes only if it fits and lane widths match.
    pack_gate = bool(pack_gate and E_pad == C_pad and C + E <= C_pad)

    # Fused gate + fc1 weight / bias: one (Din, E_pad + EH_pad) matrix (opt 1).
    w1f = jnp.zeros((Din, E_pad + EH_pad), jnp.float32)
    w1f = w1f.at[:, :E].set(jnp.asarray(wg, jnp.float32))
    w1f = w1f.at[:, E_pad:E_pad + EH].set(
        jnp.concatenate([jnp.asarray(p[0], jnp.float32) for p in expert_params], axis=1))
    b1f = jnp.zeros((1, E_pad + EH_pad), jnp.float32)
    b1f = b1f.at[:, :E].set(jnp.asarray(bg, jnp.float32).reshape(1, -1))
    b1f = b1f.at[:, E_pad:E_pad + EH].set(
        jnp.concatenate([jnp.asarray(p[1], jnp.float32).reshape(1, -1)
                         for p in expert_params], axis=1))

    # Fused fc2∘mapper weight with the b2∘mapper bias folded in as extra
    # contraction rows (opt 3) and, when possible, identity columns that copy
    # the gate into the output pad lanes for free (opt 4).
    w2m = jnp.concatenate([jnp.asarray(p[2], jnp.float32) @ jnp.asarray(p[4], jnp.float32)
                           for p in expert_params], axis=0)            # (EH, C)
    b2m = jnp.stack([(jnp.asarray(p[3], jnp.float32).reshape(1, -1)
                      @ jnp.asarray(p[4], jnp.float32)).reshape(-1)
                     for p in expert_params], axis=0)                  # (E, C)
    w2f = jnp.zeros((EH_pad + E_pad, C_pad), jnp.float32)
    w2f = w2f.at[:EH, :C].set(w2m)
    w2f = w2f.at[EH_pad:EH_pad + E, :C].set(b2m)
    if pack_gate:
        # out[:, C+e] = gate[:, e]  (exact: all other weight entries in those
        # columns are zero, so the MXU just passes the gate through).
        w2f = w2f.at[EH_pad + jnp.arange(E), C + jnp.arange(E)].set(1.0)

    seg_np = np.zeros((EH_pad, E_pad), np.float32)
    seg_np[np.arange(EH), np.arange(EH) // H] = 1.0                    # 0/1 selector
    seg = jnp.asarray(seg_np)

    if matmul_dtype is not None:
        w1f = w1f.astype(matmul_dtype)
        w2f = w2f.astype(matmul_dtype)

    return {
        "w1f": w1f, "b1f": b1f, "w2f": w2f, "seg": seg,
        "num_experts": E, "hidden_per_expert": H, "num_classes": C,
        "e_pad": E_pad, "pack_gate": pack_gate,
    }


def dynamic_expert_forward(x, packed, *, tb=None):
    w1f, b1f, w2f, seg = (packed[k] for k in ("w1f", "b1f", "w2f", "seg"))
    E = packed["num_experts"]
    H = packed["hidden_per_expert"]
    C = packed["num_classes"]
    E_pad = packed["e_pad"]
    pack_gate = packed["pack_gate"]
    EH_pad, _ = seg.shape
    C_pad = w2f.shape[1]
    w1_cols = w1f.shape[1]
    w2_rows = w2f.shape[0]

    B, Din = x.shape
    out_dtype = x.dtype   # emit bf16 here if downstream tolerates halved output HBM writes

    if tb is None:
        tb = _pick_tb(B)
    B_pad = _round_up(B, tb)
    x_in = x.astype(w1f.dtype)
    if B_pad != B:                              # pad instead of asserting divisibility
        x_in = jnp.pad(x_in, ((0, B_pad - B), (0, 0)))
    grid = (B_pad // tb,)

    # Explicit VMEM budget (resident weights + double-buffered I/O tiles).
    resident = 4 * (w1f.size + b1f.size + w2f.size + seg.size)
    per_step_io = 4 * tb * (Din + C_pad + (0 if pack_gate else E_pad))
    vmem_limit = int(min(max(4 * (resident + per_step_io), 32 * 1024 * 1024),
                         64 * 1024 * 1024))

    kernel = functools.partial(dynamic_expert_kernel, e_pad=E_pad,
                               hidden_per_expert=H)

    if pack_gate:
        out_shape = jax.ShapeDtypeStruct((B_pad, C_pad), out_dtype)
        out_specs = pl.BlockSpec((tb, C_pad), lambda i: (i, 0))
    else:
        out_shape = (jax.ShapeDtypeStruct((B_pad, C_pad), out_dtype),
                     jax.ShapeDtypeStruct((B_pad, E_pad), out_dtype))
        out_specs = (pl.BlockSpec((tb, C_pad), lambda i: (i, 0)),
                     pl.BlockSpec((tb, E_pad), lambda i: (i, 0)))

    res = pl.pallas_call(
        kernel,
        out_shape=out_shape,
        grid_spec=pltpu.PrefetchScalarGridSpec(
            num_scalar_prefetch=0,
            grid=grid,
            in_specs=[
                pl.BlockSpec((tb, Din), lambda i: (i, 0)),        # x tile
                # Constant index maps keep the weights VMEM-resident (no
                # per-step re-DMA).  For production-scale Din/E/C add
                # pipeline_mode=pl.Buffered(1) to these specs (drops the
                # second, never-used weight buffer) and tile EH with an extra
                # "arbitrary" reduction axis before v7x's 64 MiB VMEM is hit.
                pl.BlockSpec((Din, w1_cols), lambda i: (0, 0)),   # fused gate+fc1 weight
                pl.BlockSpec((1, w1_cols), lambda i: (0, 0)),     # fused gate+fc1 bias
                pl.BlockSpec((w2_rows, C_pad), lambda i: (0, 0)), # fused fc2∘mapper(+bias) weight
                pl.BlockSpec((EH_pad, E_pad), lambda i: (0, 0)),  # expert selector
            ],
            out_specs=out_specs,
        ),
        compiler_params=pltpu.CompilerParams(
            dimension_semantics=("parallel",),
            vmem_limit_bytes=vmem_limit),
    )(x_in, w1f, b1f, w2f, seg)

    if pack_gate:
        mixed, gate = res[:B, :C], res[:B, C:C + E]
    else:
        mixed, gate = res[0][:B, :C], res[1][:B, :E]
    return mixed, gate


# ------------------------- deterministic param init ---------------------------
def xavier_uniform(key, fan_in, fan_out):
    bound = (6.0 / (fan_in + fan_out)) ** 0.5
    return jax.random.uniform(key, (fan_in, fan_out), jnp.float32, -bound, bound)


def linear_bias(key, fan_in, fan_out):
    bound = 1.0 / (fan_in ** 0.5)
    return jax.random.uniform(key, (1, fan_out), jnp.float32, -bound, bound)


def kaiming_linear_weight(key, fan_in, fan_out):
    bound = 1.0 / (fan_in ** 0.5)
    return jax.random.uniform(key, (fan_in, fan_out), jnp.float32, -bound, bound)


# ----------------------------- pure-JAX reference -----------------------------
def dynamic_expert_ref(x, wg, bg, experts):
    g = x @ wg + bg
    outs = []
    for (w1, b1, w2, b2, wm) in experts:
        h = x @ w1 + b1
        mu = jnp.mean(h, axis=-1, keepdims=True)
        var = jnp.mean((h - mu) ** 2, axis=-1, keepdims=True)
        a = jnp.maximum((h - mu) * jax.lax.rsqrt(var + EPS), 0.0)
        outs.append((a @ w2 + b2) @ wm)
    eo = jnp.stack(outs, axis=1)                       # (B, E, C)
    mixed = jnp.einsum("be,bec->bc", g, eo)            # gate_uns @ stack, squeezed
    return mixed, g, eo


if __name__ == "__main__":
    # Small shapes consistent with DynamicExpert (scaled-down defaults).  The
    # batch is deliberately not a multiple of the tile to exercise padding.
    batch = 500                 # -> two 256-row parallel blocks after padding
    input_size = 128
    class_per_task = 16
    num_experts = 3
    hidden_per_expert = 16      # hidden_size/class_per_task * len(task_classes)
    total_classes = num_experts * class_per_task

    root = jax.random.PRNGKey(0)
    keys = jax.random.split(root, 3 + 5 * num_experts)

    x = jax.random.normal(keys[0], (batch, input_size), jnp.float32)
    wg = kaiming_linear_weight(keys[1], input_size, num_experts)
    bg = linear_bias(keys[2], input_size, num_experts)

    experts = []
    for e in range(num_experts):
        k = keys[3 + 5 * e: 3 + 5 * (e + 1)]
        w1 = xavier_uniform(k[0], input_size, hidden_per_expert)
        b1 = linear_bias(k[1], input_size, hidden_per_expert)
        w2 = xavier_uniform(k[2], hidden_per_expert, class_per_task)
        b2 = linear_bias(k[3], hidden_per_expert, class_per_task)
        # expanded mapper (expand_gmm): only this expert's class block nonzero
        wm_blk = kaiming_linear_weight(k[4], class_per_task, class_per_task)
        wm = jnp.zeros((class_per_task, total_classes), jnp.float32)
        wm = wm.at[:, e * class_per_task:(e + 1) * class_per_task].set(wm_blk)
        experts.append((w1, b1, w2, b2, wm))

    packed = pack_dynamic_expert_params(wg, bg, experts)  # matmul_dtype=jnp.bfloat16 optional

    mixed, gate = dynamic_expert_forward(x, packed)
    mixed = jax.block_until_ready(mixed)
    gate = jax.block_until_ready(gate)

    ref_mixed, ref_gate, _ = dynamic_expert_ref(x, wg, bg, experts)

    assert mixed.shape == (batch, total_classes)
    assert gate.shape == (batch, num_experts)
    assert jnp.allclose(gate, ref_gate, atol=1e-4, rtol=1e-4), "gate mismatch"
    assert jnp.allclose(mixed, ref_mixed, atol=1e-4, rtol=1e-4), "mixture mismatch"

    print("KERNEL_OK")
</pallas_src>

<mosaic_0001>
module attributes {stable_mosaic.version = 11 : i64} {
  func.func @dynamic_expert_kernel(%arg0: i32, %arg1: memref<256x128xf32, #tpu.memory_space<vmem>>, %arg2: memref<128x256xf32, #tpu.memory_space<vmem>>, %arg3: memref<1x256xf32, #tpu.memory_space<vmem>>, %arg4: memref<256x128xf32, #tpu.memory_space<vmem>>, %arg5: memref<128x128xf32, #tpu.memory_space<vmem>>, %arg6: memref<256x128xf32, #tpu.memory_space<vmem>>) attributes {dimension_semantics = [#tpu.dimension_semantics<parallel>], iteration_bounds = array<i64: 2>, scalar_prefetch = 0 : i64, scratch_operands = 0 : i64, tpu.core_type = #tpu.core_type<tc>, window_params = [{transform_indices = @transform_0, window_bounds = array<i64: 256, 128>}, {pipeline_mode = #tpu.pipeline_mode<synchronous>, transform_indices = @transform_1, window_bounds = array<i64: 128, 256>}, {pipeline_mode = #tpu.pipeline_mode<synchronous>, transform_indices = @transform_2, window_bounds = array<i64: 1, 256>}, {pipeline_mode = #tpu.pipeline_mode<synchronous>, transform_indices = @transform_3, window_bounds = array<i64: 256, 128>}, {pipeline_mode = #tpu.pipeline_mode<synchronous>, transform_indices = @transform_4, window_bounds = array<i64: 128, 128>}, {transform_indices = @transform_5, window_bounds = array<i64: 256, 128>}]} {
    %c0 = arith.constant 0 : index
    %c0_0 = arith.constant 0 : index
    %0 = vector.load %arg1[%c0, %c0_0] : memref<256x128xf32, #tpu.memory_space<vmem>>, vector<256x128xf32>
    %c0_1 = arith.constant 0 : index
    %c0_2 = arith.constant 0 : index
    %1 = vector.load %arg5[%c0_1, %c0_2] : memref<128x128xf32, #tpu.memory_space<vmem>>, vector<128x128xf32>
    %c0_3 = arith.constant 0 : index
    %c0_4 = arith.constant 0 : index
    %2 = vector.load %arg2[%c0_3, %c0_4] : memref<128x256xf32, #tpu.memory_space<vmem>>, vector<128x256xf32>
    %cst = arith.constant dense<0.000000e+00> : vector<256x256xf32>
    %3 = tpu.matmul %0, %2, %cst {dimension_numbers = #tpu.dot_dimension_numbers<[1], [0], [0], [1], [0, 0, 1, 1], [], []>} : vector<256x128xf32>, vector<128x256xf32>, vector<256x256xf32> -> vector<256x256xf32>
    %c0_5 = arith.constant 0 : index
    %c0_6 = arith.constant 0 : index
    %4 = vector.load %arg3[%c0_5, %c0_6] : memref<1x256xf32, #tpu.memory_space<vmem>>, vector<1x256xf32>
    %5 = vector.broadcast %4 : vector<1x256xf32> to vector<256x256xf32>
    %6 = arith.addf %3, %5 : vector<256x256xf32>
    %7 = vector.extract_strided_slice %6 {offsets = [0, 0], sizes = [256, 128], strides = [1, 1]} : vector<256x256xf32> to vector<256x128xf32>
    %8 = vector.extract_strided_slice %6 {offsets = [0, 128], sizes = [256, 128], strides = [1, 1]} : vector<256x256xf32> to vector<256x128xf32>
    %9 = arith.mulf %8, %8 : vector<256x128xf32>
    %10 = tpu.concatenate %8, %9 in 0 : vector<256x128xf32>, vector<256x128xf32> -> vector<512x128xf32>
    %cst_7 = arith.constant dense<0.000000e+00> : vector<512x128xf32>
    %11 = tpu.matmul %10, %1, %cst_7 {dimension_numbers = #tpu.dot_dimension_numbers<[1], [0], [0], [1], [0, 0, 1, 1], [], []>} : vector<512x128xf32>, vector<128x128xf32>, vector<512x128xf32> -> vector<512x128xf32>
    %cst_8 = arith.constant 6.250000e-02 : f32
    %12 = vector.broadcast %cst_8 : f32 to vector<512x128xf32>
    %13 = arith.mulf %11, %12 : vector<512x128xf32>
    %14 = vector.extract_strided_slice %13 {offsets = [0, 0], sizes = [256, 128], strides = [1, 1]} : vector<512x128xf32> to vector<256x128xf32>
    %15 = vector.extract_strided_slice %13 {offsets = [256, 0], sizes = [256, 128], strides = [1, 1]} : vector<512x128xf32> to vector<256x128xf32>
    %16 = arith.mulf %14, %14 : vector<256x128xf32>
    %17 = arith.subf %15, %16 : vector<256x128xf32>
    %cst_9 = arith.constant 0.000000e+00 : f32
    %18 = vector.broadcast %cst_9 : f32 to vector<256x128xf32>
    %19 = arith.maximumf %17, %18 : vector<256x128xf32>
    %cst_10 = arith.constant 9.99999974E-6 : f32
    %20 = vector.broadcast %cst_10 : f32 to vector<256x128xf32>
    %21 = arith.addf %19, %20 : vector<256x128xf32>
    %22 = math.rsqrt %21 : vector<256x128xf32>
    %23 = tpu.concatenate %14, %22, %7 in 0 : vector<256x128xf32>, vector<256x128xf32>, vector<256x128xf32> -> vector<768x128xf32>
    %cst_11 = arith.constant dense<0.000000e+00> : vector<768x128xf32>
    %24 = tpu.matmul %23, %1, %cst_11 {dimension_numbers = #tpu.dot_dimension_numbers<[1], [1], [0], [0], [0, 0, 1, 0], [], []>} : vector<768x128xf32>, vector<128x128xf32>, vector<768x128xf32> -> vector<768x128xf32>
    %25 = vector.extract_strided_slice %24 {offsets = [0, 0], sizes = [256, 128], strides = [1, 1]} : vector<768x128xf32> to vector<256x128xf32>
    %26 = arith.subf %8, %25 : vector<256x128xf32>
    %27 = vector.extract_strided_slice %24 {offsets = [256, 0], sizes = [256, 128], strides = [1, 1]} : vector<768x128xf32> to vector<256x128xf32>
    %28 = arith.mulf %26, %27 : vector<256x128xf32>
    %cst_12 = arith.constant 0.000000e+00 : f32
    %29 = vector.broadcast %cst_12 : f32 to vector<256x128xf32>
    %30 = arith.maximumf %28, %29 : vector<256x128xf32>
    %31 = vector.extract_strided_slice %24 {offsets = [512, 0], sizes = [256, 128], strides = [1, 1]} : vector<768x128xf32> to vector<256x128xf32>
    %32 = arith.mulf %30, %31 : vector<256x128xf32>
    %33 = tpu.concatenate %32, %7 in 1 : vector<256x128xf32>, vector<256x128xf32> -> vector<256x256xf32>
    %c0_13 = arith.constant 0 : index
    %c0_14 = arith.constant 0 : index
    %34 = vector.load %arg4[%c0_13, %c0_14] : memref<256x128xf32, #tpu.memory_space<vmem>>, vector<256x128xf32>
    %cst_15 = arith.constant dense<0.000000e+00> : vector<256x128xf32>
    %35 = tpu.matmul %33, %34, %cst_15 {dimension_numbers = #tpu.dot_dimension_numbers<[1], [0], [0], [1], [0, 0, 1, 1], [], []>} : vector<256x256xf32>, vector<256x128xf32>, vector<256x128xf32> -> vector<256x128xf32>
    %c0_16 = arith.constant 0 : index
    %c0_17 = arith.constant 0 : index
    %36 = vector.load %arg6[%c0_16, %c0_17] : memref<256x128xf32, #tpu.memory_space<vmem>>, vector<256x128xf32>
    tpu.vector_store %arg6[%c0_16, %c0_17], %35 {strides = array<i32>} : memref<256x128xf32, #tpu.memory_space<vmem>>, vector<256x128xf32>,
    return
  }
  func.func @transform_0(%arg0: i32) -> (i32, i32) {
    %c0_i32 = arith.constant 0 : i32
    %c0_i32_0 = arith.constant 0 : i32
    return %arg0, %c0_i32 : i32, i32
  }
  func.func @transform_1(%arg0: i32) -> (i32, i32) {
    %c0_i32 = arith.constant 0 : i32
    %c0_i32_0 = arith.constant 0 : i32
    %c0_i32_1 = arith.constant 0 : i32
    return %c0_i32, %c0_i32_0 : i32, i32
  }
  func.func @transform_2(%arg0: i32) -> (i32, i32) {
    %c0_i32 = arith.constant 0 : i32
    %c0_i32_0 = arith.constant 0 : i32
    %c0_i32_1 = arith.constant 0 : i32
    return %c0_i32, %c0_i32_0 : i32, i32
  }
  func.func @transform_3(%arg0: i32) -> (i32, i32) {
    %c0_i32 = arith.constant 0 : i32
    %c0_i32_0 = arith.constant 0 : i32
    %c0_i32_1 = arith.constant 0 : i32
    return %c0_i32, %c0_i32_0 : i32, i32
  }
  func.func @transform_4(%arg0: i32) -> (i32, i32) {
    %c0_i32 = arith.constant 0 : i32
    %c0_i32_0 = arith.constant 0 : i32
    %c0_i32_1 = arith.constant 0 : i32
    return %c0_i32, %c0_i32_0 : i32, i32
  }
  func.func @transform_5(%arg0: i32) -> (i32, i32) {
    %c0_i32 = arith.constant 0 : i32
    %c0_i32_0 = arith.constant 0 : i32
    return %arg0, %c0_i32 : i32, i32
  }
}

</mosaic_0001>

<llo_original>
// kernel: tpu_custom_call.1
$region0: #{tpu_custom_call.1}
  #allocation0 [shape = 'u32[]', space=smem, size = 0x4, offset = 0x4, fixed_abs, tag = 'smem constant byte address 0x4 - core index']
  #allocation1 [shape = 'u32[144,128]{1,0:T(1,128)}', space=vmem, size = 0x12000, scoped, tag = 'internal scratch']
  %s0 = inlined_call_operand.hbm [shape: f32[512,128], index: 0, kind: input, shape index: {}]
  %s1 = inlined_call_operand.hbm [shape: f32[128,256], index: 1, kind: input, shape index: {}]
  %s2 = inlined_call_operand.vmem [shape: f32[1,256], index: 2, kind: input, shape index: {}]
  %s3 = inlined_call_operand.hbm [shape: f32[256,128], index: 3, kind: input, shape index: {}]
  %s4 = inlined_call_operand.hbm [shape: f32[128,128], index: 4, kind: input, shape index: {}]
  %s5 = inlined_call_operand.hbm [shape: f32[512,128], index: 5, kind: output, shape index: {}]
  %s6 = sld [smem:[#allocation0]]
  $region69: #{tpu_custom_call.1} parent=0
    _
  %s8 = ssub.s32 1, %s6
  %s9 = scalar_select 0, %s8, %s6
  $region1: #{tpu_custom_call.1} parent=0
    #allocation2 [shape = 'u8[262144]{0}', space=vmem, size = 0x40000, scoped, tag = 'input window, operand 0']
    #allocation3 [shape = 's32[2]{0}', space=sflag, size = 0x8, scoped, tag = 'scoped memory for tpu_custom_call.1']
    #allocation4 [shape = 's32[2]{0}', space=sflag, size = 0x8, scoped, tag = 'scoped memory for tpu_custom_call.1']
    #allocation5 [shape = 'u8[131072]{0}', space=vmem, size = 0x20000, scoped, tag = 'input window, operand 1, single buffered']
    #allocation6 [shape = 's32[1]{0}', space=sflag, size = 0x4, scoped, tag = 'scoped memory for tpu_custom_call.1']
    #allocation7 [shape = 'u8[131072]{0}', space=vmem, size = 0x20000, scoped, tag = 'input window, operand 3, single buffered']
    #allocation8 [shape = 'u8[65536]{0}', space=vmem, size = 0x10000, scoped, tag = 'input window, operand 4, single buffered']
    #allocation9 [shape = 's32[1]{0}', space=sflag, size = 0x4, scoped, tag = 'scoped memory for tpu_custom_call.1']
    #allocation10 [shape = 'u8[262144]{0}', space=vmem, size = 0x40000, scoped, tag = 'output window, operand 0']
    %10 = vsyncpa [#allocation3], 0
    %s11 = scalar_lea.sflag [#allocation3], 1
    %12 = vsyncpa %s11, 0
    %13 = vsyncpa [#allocation6], 0
    %14 = vsyncpa [#allocation9], 0
    %15 = vsyncpa [#allocation4], 0
    %s16 = scalar_lea.sflag [#allocation4], 1
    %17 = vsyncpa %s16, 0
    loop: start=0, step=1, limit=4
    $region2: #{tpu_custom_call.1} parent=1 // loop_pre_header
      _
    $region3: #{tpu_custom_call.1} parent=1 // loop_header
      %s19 = sphi 0, %s23
      %p20 = scmp.ge.s32.totalorder %s19, 4
      %s29 = sphi 0, %s31
      %s32 = sphi 0, %s29
      %s33 = sphi 0, %s32
      %s49 = sphi 0, %s33
      %s53 = sphi 0, %s53
      %s55 = sphi 0, %s53
      %s56 = sphi 0, %s55
      %s70 = sphi 0, %s56
      %s74 = sphi 0, %s74
      %s76 = sphi 0, %s74
      %s77 = sphi 0, %s76
      %s91 = sphi 0, %s77
      %s95 = sphi 0, %s95
      %s97 = sphi 0, %s95
      %s98 = sphi 0, %s97
      %s112 = sphi 0, %s98
      %s116 = sphi 0, %s116
      %s118 = sphi 0, %s116
      %s119 = sphi 0, %s118
      %s133 = sphi 0, %s119
      %s139 = sphi 0, %s141
      %s142 = sphi 0, %s139
      %s143 = sphi 0, %s142
      %s159 = sphi 0, %s143
    $region4: #{tpu_custom_call.1} parent=1 // loop_header_branch
      %22 = sbr.rel (%p20) target = $region8
    $region5: #{tpu_custom_call.1} parent=1 // loop_body
      %s24 = ssub.s32 %s19, 1
      %s25 = ssub.s32 %s19, 2
      %s26 = sadd.s32 %s19, 1
      %s27 = ssub.s32 %s19, %s26
      %p28 = scmp.eq.s32.totalorder %s27, 0
      %s30 = sadd.s32 %s29, 1
      %s31 = scalar_select %p28, %s29, %s30
      %p34 = pneg %p28
      %p35 = scmp.eq.s32.totalorder %s19, 1
      %p36 = por %p34, %p35
      %p37 = scmp.ne.s32.totalorder %s29, %s32
      %p38 = scmp.eq.s32.totalorder %s19, 0
      %p39 = por %p37, %p38
      %p40 = scmp.ne.s32.totalorder %s29, %s32
      %p41 = scmp.eq.s32.totalorder %s24, 1
      %p42 = por %p40, %p41
      %p43 = scmp.ne.s32.totalorder %s32, %s33
      %p44 = scmp.eq.s32.totalorder %s24, 0
      %p45 = por %p43, %p44
      %p46 = scmp.ne.s32.totalorder %s32, %s33
      %p47 = scmp.eq.s32.totalorder %s25, 1
      %p48 = por %p46, %p47
      %p50 = scmp.ne.s32.totalorder %s33, %s49
      %p51 = scmp.eq.s32.totalorder %s25, 0
      %p52 = por %p50, %p51
      %s54 = sadd.s32 %s53, 1
      %p57 = scmp.eq.s32.totalorder %s19, 1
      %p58 = scmp.ne.s32.totalorder %s53, %s55
      %p59 = scmp.eq.s32.totalorder %s19, 0
      %p60 = por %p58, %p59
      %p61 = scmp.ne.s32.totalorder %s53, %s55
      %p62 = scmp.eq.s32.totalorder %s24, 1
      %p63 = por %p61, %p62
      %p64 = scmp.ne.s32.totalorder %s55, %s56
      %p65 = scmp.eq.s32.totalorder %s24, 0
      %p66 = por %p64, %p65
      %p67 = scmp.ne.s32.totalorder %s55, %s56
      %p68 = scmp.eq.s32.totalorder %s25, 1
      %p69 = por %p67, %p68
      %p71 = scmp.ne.s32.totalorder %s56, %s70
      %p72 = scmp.eq.s32.totalorder %s25, 0
      %p73 = por %p71, %p72
      %s75 = sadd.s32 %s74, 1
      %p78 = scmp.eq.s32.totalorder %s19, 1
      %p79 = scmp.ne.s32.totalorder %s74, %s76
      %p80 = scmp.eq.s32.totalorder %s19, 0
      %p81 = por %p79, %p80
      %p82 = scmp.ne.s32.totalorder %s74, %s76
      %p83 = scmp.eq.s32.totalorder %s24, 1
      %p84 = por %p82, %p83
      %p85 = scmp.ne.s32.totalorder %s76, %s77
      %p86 = scmp.eq.s32.totalorder %s24, 0
      %p87 = por %p85, %p86
      %p88 = scmp.ne.s32.totalorder %s76, %s77
      %p89 = scmp.eq.s32.totalorder %s25, 1
      %p90 = por %p88, %p89
      %p92 = scmp.ne.s32.totalorder %s77, %s91
      %p93 = scmp.eq.s32.totalorder %s25, 0
      %p94 = por %p92, %p93
      %s96 = sadd.s32 %s95, 1
      %p99 = scmp.eq.s32.totalorder %s19, 1
      %p100 = scmp.ne.s32.totalorder %s95, %s97
      %p101 = scmp.eq.s32.totalorder %s19, 0
      %p102 = por %p100, %p101
      %p103 = scmp.ne.s32.totalorder %s95, %s97
      %p104 = scmp.eq.s32.totalorder %s24, 1
      %p105 = por %p103, %p104
      %p106 = scmp.ne.s32.totalorder %s97, %s98
      %p107 = scmp.eq.s32.totalorder %s24, 0
      %p108 = por %p106, %p107
      %p109 = scmp.ne.s32.totalorder %s97, %s98
      %p110 = scmp.eq.s32.totalorder %s25, 1
      %p111 = por %p109, %p110
      %p113 = scmp.ne.s32.totalorder %s98, %s112
      %p114 = scmp.eq.s32.totalorder %s25, 0
      %p115 = por %p113, %p114
      %s117 = sadd.s32 %s116, 1
      %p120 = scmp.eq.s32.totalorder %s19, 1
      %p121 = scmp.ne.s32.totalorder %s116, %s118
      %p122 = scmp.eq.s32.totalorder %s19, 0
      %p123 = por %p121, %p122
      %p124 = scmp.ne.s32.totalorder %s116, %s118
      %p125 = scmp.eq.s32.totalorder %s24, 1
      %p126 = por %p124, %p125
      %p127 = scmp.ne.s32.totalorder %s118, %s119
      %p128 = scmp.eq.s32.totalorder %s24, 0
      %p129 = por %p127, %p128
      %p130 = scmp.ne.s32.totalorder %s118, %s119
      %p131 = scmp.eq.s32.totalorder %s25, 1
      %p132 = por %p130, %p131
      %p134 = scmp.ne.s32.totalorder %s119, %s133
      %p135 = scmp.eq.s32.totalorder %s25, 0
      %p136 = por %p134, %p135
      %s137 = ssub.s32 %s19, %s26
      %p138 = scmp.eq.s32.totalorder %s137, 0
      %s140 = sadd.s32 %s139, 1
      %s141 = scalar_select %p138, %s139, %s140
      %p144 = pneg %p138
      %p145 = scmp.eq.s32.totalorder %s19, 1
      %p146 = por %p144, %p145
      %p147 = scmp.ne.s32.totalorder %s139, %s142
      %p148 = scmp.eq.s32.totalorder %s19, 0
      %p149 = por %p147, %p148
      %p150 = scmp.ne.s32.totalorder %s139, %s142
      %p151 = scmp.eq.s32.totalorder %s24, 1
      %p152 = por %p150, %p151
      %p153 = scmp.ne.s32.totalorder %s142, %s143
      %p154 = scmp.eq.s32.totalorder %s24, 0
      %p155 = por %p153, %p154
      %p156 = scmp.ne.s32.totalorder %s142, %s143
      %p157 = scmp.eq.s32.totalorder %s25, 1
      %p158 = por %p156, %p157
      %p160 = scmp.ne.s32.totalorder %s143, %s159
      %p161 = scmp.eq.s32.totalorder %s25, 0
      %p162 = por %p160, %p161
      %p163 = scmp.le.s32.totalorder 1, %s19
      %p164 = scmp.lt.s32.totalorder %s19, 3
      %p165 = pnand %p163, %p164
      %p166 = pneg %p165
      // Predicated region
      $region9: #{tpu_custom_call.1} parent=5 // pred_check
        _
      $region10: #{tpu_custom_call.1} parent=5 // pred_check_branch
        %168 = sbr.rel (%p165) target = $region12
      $region11: #{tpu_custom_call.1} parent=5 // pred_region
        %s169 = ssub.s32 %s19, 1
        // Predicated region
        $region13: #{tpu_custom_call.1} parent=11 // pred_check
          %p170 = pneg %p66
        $region14: #{tpu_custom_call.1} parent=11 // pred_check_branch
          %172 = sbr.rel (%p170) target = $region16
        $region15: #{tpu_custom_call.1} parent=11 // pred_region
          %s174 = ssub.s32 4096, 4096
          %175 = vsyncadd [#allocation6], %s174
          %s176 = sshll.u32 [#allocation5], 4
          %s177 = int_to_ptr.vmem [resolvable:$true] %s176
          %182 = dma.hbm_to_vmem [thread:$0]  %s1, 4096, %s177, [#allocation6], 256, 256, 16
        $region16: #{tpu_custom_call.1} parent=11 // pred_fallthru
          _
        // Predicated region
        $region17: #{tpu_custom_call.1} parent=11 // pred_check
          %p183 = pneg %p87
        $region18: #{tpu_custom_call.1} parent=11 // pred_check_branch
          %185 = sbr.rel (%p183) target = $region20
        $region19: #{tpu_custom_call.1} parent=11 // pred_region
          _
        $region20: #{tpu_custom_call.1} parent=11 // pred_fallthru
          _
        // Predicated region
        $region21: #{tpu_custom_call.1} parent=11 // pred_check
          %p186 = pneg %p108
        $region22: #{tpu_custom_call.1} parent=11 // pred_check_branch
          %188 = sbr.rel (%p186) target = $region24
        $region23: #{tpu_custom_call.1} parent=11 // pred_region
          %s190 = ssub.s32 4096, 4096
          %191 = vsyncadd [#allocation6], %s190
          %s192 = sshll.u32 [#allocation7], 4
          %s193 = int_to_ptr.vmem [resolvable:$true] %s192
          %198 = dma.hbm_to_vmem [thread:$0]  %s3, 4096, %s193, [#allocation6], 128, 128, 8
        $region24: #{tpu_custom_call.1} parent=11 // pred_fallthru
          _
        // Predicated region
        $region25: #{tpu_custom_call.1} parent=11 // pred_check
          %p199 = pneg %p129
        $region26: #{tpu_custom_call.1} parent=11 // pred_check_branch
          %201 = sbr.rel (%p199) target = $region28
        $region27: #{tpu_custom_call.1} parent=11 // pred_region
          %s203 = ssub.s32 2048, 2048
          %204 = vsyncadd [#allocation9], %s203
          %s205 = sshll.u32 [#allocation8], 4
          %s206 = int_to_ptr.vmem [resolvable:$true] %s205
          %211 = dma.hbm_to_vmem [thread:$0]  %s4, 2048, %s206, [#allocation9], 128, 128, 8
        $region28: #{tpu_custom_call.1} parent=11 // pred_fallthru
          _
      $region12: #{tpu_custom_call.1} parent=5 // pred_fallthru
        _
      %p212 = scmp.lt.s32.totalorder %s19, 2
      // Predicated region
      $region29: #{tpu_custom_call.1} parent=5 // pred_check
        %p213 = pneg %p212
      $region30: #{tpu_custom_call.1} parent=5 // pred_check_branch
        %215 = sbr.rel (%p213) target = $region32
      $region31: #{tpu_custom_call.1} parent=5 // pred_region
        // Predicated region
        $region33: #{tpu_custom_call.1} parent=31 // pred_check
          %p216 = pneg %p39
        $region34: #{tpu_custom_call.1} parent=31 // pred_check_branch
          %218 = sbr.rel (%p216) target = $region36
        $region35: #{tpu_custom_call.1} parent=31 // pred_region
          %s219 = sand.u32 %s29, 1
          %s220 = scalar_lea.sflag [#allocation3], %s219
          %s221 = sand.u32 %s29, 1
          %s222 = smul.addr %s221, 256
          %s223 = scalar_lea.vmem [#allocation2], %s222
          %s224 = smul.u32 32, %s19
          %s226 = ssub.s32 4096, 4096
          %227 = vsyncadd %s220, %s226
          %s228 = smul.addr %s224, 128
          %s229 = scalar_lea.hbm %s0, %s228
          %s230 = sshll.u32 %s223, 4
          %s231 = int_to_ptr.vmem [resolvable:$true] %s230
          %236 = dma.hbm_to_vmem [thread:$0]  %s229, 4096, %s231, %s220, 128, 128, 8
        $region36: #{tpu_custom_call.1} parent=31 // pred_fallthru
          _
      $region32: #{tpu_custom_call.1} parent=5 // pred_fallthru
        _
      %p237 = scmp.le.s32.totalorder 1, %s19
      %p238 = scmp.lt.s32.totalorder %s19, 3
      %p239 = pnand %p237, %p238
      %p240 = pneg %p239
      // Predicated region
      $region37: #{tpu_custom_call.1} parent=5 // pred_check
        _
      $region38: #{tpu_custom_call.1} parent=5 // pred_check_branch
        %242 = sbr.rel (%p239) target = $region40
      $region39: #{tpu_custom_call.1} parent=5 // pred_region
        %s243 = ssub.s32 %s19, 1
        %s244 = sand.u32 %s32, 1
        %s245 = scalar_lea.sflag [#allocation3], %s244
        %s246 = sand.u32 %s32, 1
        %s247 = smul.addr %s246, 256
        %s248 = scalar_lea.vmem [#allocation2], %s247
        // Predicated region
        $region41: #{tpu_custom_call.1} parent=39 // pred_check
          %p249 = pneg %p45
        $region42: #{tpu_custom_call.1} parent=39 // pred_check_branch
          %251 = sbr.rel (%p249) target = $region44
        $region43: #{tpu_custom_call.1} parent=39 // pred_region
          %252 = dma.done %s245, 4096
        $region44: #{tpu_custom_call.1} parent=39 // pred_fallthru
          _
        // Predicated region
        $region45: #{tpu_custom_call.1} parent=39 // pred_check
          %p253 = pneg %p66
        $region46: #{tpu_custom_call.1} parent=39 // pred_check_branch
          %255 = sbr.rel (%p253) target = $region48
        $region47: #{tpu_custom_call.1} parent=39 // pred_region
          %256 = dma.done [#allocation6], 4096
        $region48: #{tpu_custom_call.1} parent=39 // pred_fallthru
          _
        // Predicated region
        $region49: #{tpu_custom_call.1} parent=39 // pred_check
          %p257 = pneg %p108
        $region50: #{tpu_custom_call.1} parent=39 // pred_check_branch
          %259 = sbr.rel (%p257) target = $region52
        $region51: #{tpu_custom_call.1} parent=39 // pred_region
          %260 = dma.done [#allocation6], 4096
        $region52: #{tpu_custom_call.1} parent=39 // pred_fallthru
          _
        // Predicated region
        $region53: #{tpu_custom_call.1} parent=39 // pred_check
          %p261 = pneg %p129
        $region54: #{tpu_custom_call.1} parent=39 // pred_check_branch
          %263 = sbr.rel (%p261) target = $region56
        $region55: #{tpu_custom_call.1} parent=39 // pred_region
          %264 = dma.done [#allocation9], 2048
        $region56: #{tpu_custom_call.1} parent=39 // pred_fallthru
          _
        %s265 = sand.u32 %s32, 1
        %s266 = scalar_lea.sflag [#allocation3], %s265
        %s267 = sand.u32 %s32, 1
        %s268 = smul.addr %s267, 256
        %s269 = scalar_lea.vmem [#allocation2], %s268
        %p270 = pneg %p45
        %p271 = pneg %p42
        %p272 = pneg %p66
        %p273 = pneg %p63
        %p274 = pneg %p87
        %p275 = pneg %p84
        %p276 = pneg %p108
        %p277 = pneg %p105
        %p278 = pneg %p129
        %p279 = pneg %p126
        %p280 = pneg %p155
        %p281 = pneg %p152
        %s282 = sand.u32 %s142, 1
        %s283 = scalar_lea.sflag [#allocation4], %s282
        %s284 = sand.u32 %s142, 1
        %s285 = smul.addr %s284, 256
        %s286 = scalar_lea.vmem [#allocation10], %s285
        %s287 = smul.u32 32, %s24
        %s288 = smul.u32 32, %s24
        %v289 = vld [vmem:[%s248] sm:$0xff]
        %v290 = vld [vmem:[%s248 + $0x8] sm:$0xff]
        %v291 = vld [vmem:[%s248 + $0x10] sm:$0xff]
        %v292 = vld [vmem:[%s248 + $0x18] sm:$0xff]
        %v293 = vld [vmem:[%s248 + $0x20] sm:$0xff]
        %v294 = vld [vmem:[%s248 + $0x28] sm:$0xff]
        %v295 = vld [vmem:[%s248 + $0x30] sm:$0xff]
        %v296 = vld [vmem:[%s248 + $0x38] sm:$0xff]
        %v297 = vld [vmem:[%s248 + $0x40] sm:$0xff]
        %v298 = vld [vmem:[%s248 + $0x48] sm:$0xff]
        %v299 = vld [vmem:[%s248 + $0x50] sm:$0xff]
        %v300 = vld [vmem:[%s248 + $0x58] sm:$0xff]
        %v301 = vld [vmem:[%s248 + $0x60] sm:$0xff]
        %v302 = vld [vmem:[%s248 + $0x68] sm:$0xff]
        %v303 = vld [vmem:[%s248 + $0x70] sm:$0xff]
        %v304 = vld [vmem:[%s248 + $0x78] sm:$0xff]
        %v305 = vld [vmem:[%s248 + $0x80] sm:$0xff]
        %v306 = vld [vmem:[%s248 + $0x88] sm:$0xff]
        %v307 = vld [vmem:[%s248 + $0x90] sm:$0xff]
        %v308 = vld [vmem:[%s248 + $0x98] sm:$0xff]
        %v309 = vld [vmem:[%s248 + $0xa0] sm:$0xff]
        %v310 = vld [vmem:[%s248 + $0xa8] sm:$0xff]
        %v311 = vld [vmem:[%s248 + $0xb0] sm:$0xff]
        %v312 = vld [vmem:[%s248 + $0xb8] sm:$0xff]
        %v313 = vld [vmem:[%s248 + $0xc0] sm:$0xff]
        %v314 = vld [vmem:[%s248 + $0xc8] sm:$0xff]
        %v315 = vld [vmem:[%s248 + $0xd0] sm:$0xff]
        %v316 = vld [vmem:[%s248 + $0xd8] sm:$0xff]
        %v317 = vld [vmem:[%s248 + $0xe0] sm:$0xff]
        %v318 = vld [vmem:[%s248 + $0xe8] sm:$0xff]
        %v319 = vld [vmem:[%s248 + $0xf0] sm:$0xff]
        %v320 = vld [vmem:[%s248 + $0xf8] sm:$0xff]
        %v321 = vld [vmem:[#allocation8] sm:$0xff]
        %v322 = vld [vmem:[#allocation8 + $0x8] sm:$0xff]
        %v323 = vld [vmem:[#allocation8 + $0x10] sm:$0xff]
        %v324 = vld [vmem:[#allocation8 + $0x18] sm:$0xff]
        %v325 = vld [vmem:[#allocation8 + $0x20] sm:$0xff]
        %v326 = vld [vmem:[#allocation8 + $0x28] sm:$0xff]
        %v327 = vld [vmem:[#allocation8 + $0x30] sm:$0xff]
        %v328 = vld [vmem:[#allocation8 + $0x38] sm:$0xff]
        %v329 = vld [vmem:[#allocation8 + $0x40] sm:$0xff]
        %v330 = vld [vmem:[#allocation8 + $0x48] sm:$0xff]
        %v331 = vld [vmem:[#allocation8 + $0x50] sm:$0xff]
        %v332 = vld [vmem:[#allocation8 + $0x58] sm:$0xff]
        %v333 = vld [vmem:[#allocation8 + $0x60] sm:$0xff]
        %v334 = vld [vmem:[#allocation8 + $0x68] sm:$0xff]
        %v335 = vld [vmem:[#allocation8 + $0x70] sm:$0xff]
        %v336 = vld [vmem:[#allocation8 + $0x78] sm:$0xff]
        %v337 = vld [vmem:[#allocation5] sm:$0xff]
        %v338 = vld [vmem:[#allocation5 + $0x8] sm:$0xff]
        %v339 = vld [vmem:[#allocation5 + $0x10] sm:$0xff]
        %v340 = vld [vmem:[#allocation5 + $0x18] sm:$0xff]
        %v341 = vld [vmem:[#allocation5 + $0x20] sm:$0xff]
        %v342 = vld [vmem:[#allocation5 + $0x28] sm:$0xff]
        %v343 = vld [vmem:[#allocation5 + $0x30] sm:$0xff]
        %v344 = vld [vmem:[#allocation5 + $0x38] sm:$0xff]
        %v345 = vld [vmem:[#allocation5 + $0x40] sm:$0xff]
        %v346 = vld [vmem:[#allocation5 + $0x48] sm:$0xff]
        %v347 = vld [vmem:[#allocation5 + $0x50] sm:$0xff]
        %v348 = vld [vmem:[#allocation5 + $0x58] sm:$0xff]
        %v349 = vld [vmem:[#allocation5 + $0x60] sm:$0xff]
        %v350 = vld [vmem:[#allocation5 + $0x68] sm:$0xff]
        %v351 = vld [vmem:[#allocation5 + $0x70] sm:$0xff]
        %v352 = vld [vmem:[#allocation5 + $0x78] sm:$0xff]
        %v353 = vld [vmem:[#allocation5 + $0x80] sm:$0xff]
        %v354 = vld [vmem:[#allocation5 + $0x88] sm:$0xff]
        %v355 = vld [vmem:[#allocation5 + $0x90] sm:$0xff]
        %v356 = vld [vmem:[#allocation5 + $0x98] sm:$0xff]
        %v357 = vld [vmem:[#allocation5 + $0xa0] sm:$0xff]
        %v358 = vld [vmem:[#allocation5 + $0xa8] sm:$0xff]
        %v359 = vld [vmem:[#allocation5 + $0xb0] sm:$0xff]
        %v360 = vld [vmem:[#allocation5 + $0xb8] sm:$0xff]
        %v361 = vld [vmem:[#allocation5 + $0xc0] sm:$0xff]
        %v362 = vld [vmem:[#allocation5 + $0xc8] sm:$0xff]
        %v363 = vld [vmem:[#allocation5 + $0xd0] sm:$0xff]
        %v364 = vld [vmem:[#allocation5 + $0xd8] sm:$0xff]
        %v365 = vld [vmem:[#allocation5 + $0xe0] sm:$0xff]
        %v366 = vld [vmem:[#allocation5 + $0xe8] sm:$0xff]
        %v367 = vld [vmem:[#allocation5 + $0xf0] sm:$0xff]
        %v368 = vld [vmem:[#allocation5 + $0xf8] sm:$0xff]
        %v369 = vld [vmem:[%s2] sm:$0x3]
        %v371 = vlaneseq
        %v372 = vshrl.u32 %v371, 7
        %v373 = vsub.s32 0, %v372
        %v374 = vrot.slane %v369, %v373
        %v375 = vlaneseq
        %v376 = vshrl.u32 %v375, 7
        %v377 = vsub.s32 1, %v376
        %v378 = vrot.slane %v369, %v377
        %381 = vmatprep.subr.mxu0 %v338
        %382 = vmatpush1.msra.mxu0 %v337
        %383 = vmatprep.subr.mxu0 %v340
        %384 = vmatpush1.msra.mxu0 %v339
        %385 = vmatprep.subr.mxu0 %v342
        %386 = vmatpush1.msra.mxu0 %v341
        %387 = vmatprep.subr.mxu0 %v344
        %388 = vmatpush1.msra.mxu0 %v343
        %389 = vmatprep.subr.mxu0 %v346
        %390 = vmatpush1.msra.mxu0 %v345
        %391 = vmatprep.subr.mxu0 %v348
        %392 = vmatpush1.msra.mxu0 %v347
        %393 = vmatprep.subr.mxu0 %v350
        %394 = vmatpush1.msra.mxu0 %v349
        %395 = vmatprep.subr.mxu0 %v352
        %396 = vmatpush1.msra.mxu0 %v351
        %397 = vmatprep.subr.mxu0 %v354
        %398 = vmatpush1.msra.mxu0 %v353
        %399 = vmatprep.subr.mxu0 %v356
        %400 = vmatpush1.msra.mxu0 %v355
        %401 = vmatprep.subr.mxu0 %v358
        %402 = vmatpush1.msra.mxu0 %v357
        %403 = vmatprep.subr.mxu0 %v360
        %404 = vmatpush1.msra.mxu0 %v359
        %405 = vmatprep.subr.mxu0 %v362
        %406 = vmatpush1.msra.mxu0 %v361
        %407 = vmatprep.subr.mxu0 %v364
        %408 = vmatpush1.msra.mxu0 %v363
        %409 = vmatprep.subr.mxu0 %v366
        %410 = vmatpush1.msra.mxu0 %v365
        %411 = vmatprep.subr.mxu0 %v368
        %412 = vmatpush1.msra.mxu0 %v367
        %413 = vmatprep.subr.mxu0 0.0
        %414 = vmatpush1.msra.mxu0 0.0
        %415 = vmatprep.subr.mxu0 0.0
        %416 = vmatpush1.msra.mxu0 0.0
        %417 = vmatprep.subr.mxu0 0.0
        %418 = vmatpush1.msra.mxu0 0.0
        %419 = vmatprep.subr.mxu0 0.0
        %420 = vmatpush1.msra.mxu0 0.0
        %421 = vmatprep.subr.mxu0 0.0
        %422 = vmatpush1.msra.mxu0 0.0
        %423 = vmatprep.subr.mxu0 0.0
        %424 = vmatpush1.msra.mxu0 0.0
        %425 = vmatprep.subr.mxu0 0.0
        %426 = vmatpush1.msra.mxu0 0.0
        %427 = vmatprep.subr.mxu0 0.0
        %428 = vmatpush1.msra.mxu0 0.0
        %429 = vmatprep.subr.mxu0 0.0
        %430 = vmatpush1.msra.mxu0 0.0
        %431 = vmatprep.subr.mxu0 0.0
        %432 = vmatpush1.msra.mxu0 0.0
        %433 = vmatprep.subr.mxu0 0.0
        %434 = vmatpush1.msra.mxu0 0.0
        %435 = vmatprep.subr.mxu0 0.0
        %436 = vmatpush1.msra.mxu0 0.0
        %437 = vmatprep.subr.mxu0 0.0
        %438 = vmatpush1.msra.mxu0 0.0
        %439 = vmatprep.subr.mxu0 0.0
        %440 = vmatpush1.msra.mxu0 0.0
        %441 = vmatprep.subr.mxu0 0.0
        %442 = vmatpush1.msra.mxu0 0.0
        %443 = vmatprep.subr.mxu0 0.0
        %444 = vmatpush1.msra.mxu0 0.0
        %445 = vmatprep.mubr.f32.mxu0 0.0
        %446 = vmatmul.mubr.f32.gmra.mrb[0].mxu0 %v289
        %v447 = vpop.f32.mrb[0].mxu0
        %v448 = vadd.f32 %v374, %v447
        %v449 = vpop.f32.mrb[0].mxu0
        %v450 = vadd.f32 %v378, %v449
        %451 = vmatprep.mubr.f32.mxu0 0.0
        %452 = vmatmul.mubr.f32.gmra.mrb[0].mxu0 %v290
        %v453 = vpop.f32.mrb[0].mxu0
        %v454 = vadd.f32 %v374, %v453
        %v455 = vpop.f32.mrb[0].mxu0
        %v456 = vadd.f32 %v378, %v455
        %457 = vmatprep.mubr.f32.mxu0 0.0
        %458 = vmatmul.mubr.f32.gmra.mrb[0].mxu0 %v291
        %v459 = vpop.f32.mrb[0].mxu0
        %v460 = vadd.f32 %v374, %v459
        %v461 = vpop.f32.mrb[0].mxu0
        %v462 = vadd.f32 %v378, %v461
        %463 = vmatprep.mubr.f32.mxu0 0.0
        %464 = vmatmul.mubr.f32.gmra.mrb[0].mxu0 %v292
        %v465 = vpop.f32.mrb[0].mxu0
        %v466 = vadd.f32 %v374, %v465
        %v467 = vpop.f32.mrb[0].mxu0
        %v468 = vadd.f32 %v378, %v467
        %469 = vmatprep.mubr.f32.mxu0 0.0
        %470 = vmatmul.mubr.f32.gmra.mrb[0].mxu0 %v293
        %v471 = vpop.f32.mrb[0].mxu0
        %v472 = vadd.f32 %v374, %v471
        %v473 = vpop.f32.mrb[0].mxu0
        %v474 = vadd.f32 %v378, %v473
        %475 = vmatprep.mubr.f32.mxu0 0.0
        %476 = vmatmul.mubr.f32.gmra.mrb[0].mxu0 %v294
        %v477 = vpop.f32.mrb[0].mxu0
        %v478 = vadd.f32 %v374, %v477
        %v479 = vpop.f32.mrb[0].mxu0
        %v480 = vadd.f32 %v378, %v479
        %481 = vmatprep.mubr.f32.mxu0 0.0
        %482 = vmatmul.mubr.f32.gmra.mrb[0].mxu0 %v295
        %v483 = vpop.f32.mrb[0].mxu0
        %v484 = vadd.f32 %v374, %v483
        %v485 = vpop.f32.mrb[0].mxu0
        %v486 = vadd.f32 %v378, %v485
        %487 = vmatprep.mubr.f32.mxu0 0.0
        %488 = vmatmul.mubr.f32.gmra.mrb[0].mxu0 %v296
        %v489 = vpop.f32.mrb[0].mxu0
        %v490 = vadd.f32 %v374, %v489
        %v491 = vpop.f32.mrb[0].mxu0
        %v492 = vadd.f32 %v378, %v491
        %493 = vmatprep.mubr.f32.mxu0 0.0
        %494 = vmatmul.mubr.f32.gmra.mrb[0].mxu0 %v297
        %v495 = vpop.f32.mrb[0].mxu0
        %v496 = vadd.f32 %v374, %v495
        %v497 = vpop.f32.mrb[0].mxu0
        %v498 = vadd.f32 %v378, %v497
        %499 = vmatprep.mubr.f32.mxu0 0.0
        %500 = vmatmul.mubr.f32.gmra.mrb[0].mxu0 %v298
        %v501 = vpop.f32.mrb[0].mxu0
        %v502 = vadd.f32 %v374, %v501
        %v503 = vpop.f32.mrb[0].mxu0
        %v504 = vadd.f32 %v378, %v503
        %505 = vmatprep.mubr.f32.mxu0 0.0
        %506 = vmatmul.mubr.f32.gmra.mrb[0].mxu0 %v299
        %v507 = vpop.f32.mrb[0].mxu0
        %v508 = vadd.f32 %v374, %v507
        %v509 = vpop.f32.mrb[0].mxu0
        %v510 = vadd.f32 %v378, %v509
        %511 = vmatprep.mubr.f32.mxu0 0.0
        %512 = vmatmul.mubr.f32.gmra.mrb[0].mxu0 %v300
        %v513 = vpop.f32.mrb[0].mxu0
        %v514 = vadd.f32 %v374, %v513
        %v515 = vpop.f32.mrb[0].mxu0
        %v516 = vadd.f32 %v378, %v515
        %517 = vmatprep.mubr.f32.mxu0 0.0
        %518 = vmatmul.mubr.f32.gmra.mrb[0].mxu0 %v301
        %v519 = vpop.f32.mrb[0].mxu0
        %v520 = vadd.f32 %v374, %v519
        %v521 = vpop.f32.mrb[0].mxu0
        %v522 = vadd.f32 %v378, %v521
        %523 = vmatprep.mubr.f32.mxu0 0.0
        %524 = vmatmul.mubr.f32.gmra.mrb[0].mxu0 %v302
        %v525 = vpop.f32.mrb[0].mxu0
        %v526 = vadd.f32 %v374, %v525
        %v527 = vpop.f32.mrb[0].mxu0
        %v528 = vadd.f32 %v378, %v527
        %529 = vmatprep.mubr.f32.mxu0 0.0
        %530 = vmatmul.mubr.f32.gmra.mrb[0].mxu0 %v303
        %v531 = vpop.f32.mrb[0].mxu0
        %v532 = vadd.f32 %v374, %v531
        %v533 = vpop.f32.mrb[0].mxu0
        %v534 = vadd.f32 %v378, %v533
        %535 = vmatprep.mubr.f32.mxu0 0.0
        %536 = vmatmul.mubr.f32.gmra.mrb[0].mxu0 %v304
        %v537 = vpop.f32.mrb[0].mxu0
        %v538 = vadd.f32 %v374, %v537
        %v539 = vpop.f32.mrb[0].mxu0
        %v540 = vadd.f32 %v378, %v539
        %541 = vmatprep.mubr.f32.mxu0 0.0
        %542 = vmatmul.mubr.f32.gmra.mrb[0].mxu0 %v305
        %v543 = vpop.f32.mrb[0].mxu0
        %v544 = vadd.f32 %v374, %v543
        %v545 = vpop.f32.mrb[0].mxu0
        %v546 = vadd.f32 %v378, %v545
        %547 = vmatprep.mubr.f32.mxu0 0.0
        %548 = vmatmul.mubr.f32.gmra.mrb[0].mxu0 %v306
        %v549 = vpop.f32.mrb[0].mxu0
        %v550 = vadd.f32 %v374, %v549
        %v551 = vpop.f32.mrb[0].mxu0
        %v552 = vadd.f32 %v378, %v551
        %553 = vmatprep.mubr.f32.mxu0 0.0
        %554 = vmatmul.mubr.f32.gmra.mrb[0].mxu0 %v307
        %v555 = vpop.f32.mrb[0].mxu0
        %v556 = vadd.f32 %v374, %v555
        %v557 = vpop.f32.mrb[0].mxu0
        %v558 = vadd.f32 %v378, %v557
        %559 = vmatprep.mubr.f32.mxu0 0.0
        %560 = vmatmul.mubr.f32.gmra.mrb[0].mxu0 %v308
        %v561 = vpop.f32.mrb[0].mxu0
        %v562 = vadd.f32 %v374, %v561
        %v563 = vpop.f32.mrb[0].mxu0
        %v564 = vadd.f32 %v378, %v563
        %565 = vmatprep.mubr.f32.mxu0 0.0
        %566 = vmatmul.mubr.f32.gmra.mrb[0].mxu0 %v309
        %v567 = vpop.f32.mrb[0].mxu0
        %v568 = vadd.f32 %v374, %v567
        %v569 = vpop.f32.mrb[0].mxu0
        %v570 = vadd.f32 %v378, %v569
        %571 = vmatprep.mubr.f32.mxu0 0.0
        %572 = vmatmul.mubr.f32.gmra.mrb[0].mxu0 %v310
        %v573 = vpop.f32.mrb[0].mxu0
        %v574 = vadd.f32 %v374, %v573
        %v575 = vpop.f32.mrb[0].mxu0
        %v576 = vadd.f32 %v378, %v575
        %577 = vmatprep.mubr.f32.mxu0 0.0
        %578 = vmatmul.mubr.f32.gmra.mrb[0].mxu0 %v311
        %v579 = vpop.f32.mrb[0].mxu0
        %v580 = vadd.f32 %v374, %v579
        %v581 = vpop.f32.mrb[0].mxu0
        %v582 = vadd.f32 %v378, %v581
        %583 = vmatprep.mubr.f32.mxu0 0.0
        %584 = vmatmul.mubr.f32.gmra.mrb[0].mxu0 %v312
        %v585 = vpop.f32.mrb[0].mxu0
        %v586 = vadd.f32 %v374, %v585
        %v587 = vpop.f32.mrb[0].mxu0
        %v588 = vadd.f32 %v378, %v587
        %589 = vmatprep.mubr.f32.mxu0 0.0
        %590 = vmatmul.mubr.f32.gmra.mrb[0].mxu0 %v313
        %v591 = vpop.f32.mrb[0].mxu0
        %v592 = vadd.f32 %v374, %v591
        %v593 = vpop.f32.mrb[0].mxu0
        %v594 = vadd.f32 %v378, %v593
        %595 = vmatprep.mubr.f32.mxu0 0.0
        %596 = vmatmul.mubr.f32.gmra.mrb[0].mxu0 %v314
        %v597 = vpop.f32.mrb[0].mxu0
        %v598 = vadd.f32 %v374, %v597
        %v599 = vpop.f32.mrb[0].mxu0
        %v600 = vadd.f32 %v378, %v599
        %601 = vmatprep.mubr.f32.mxu0 0.0
        %602 = vmatmul.mubr.f32.gmra.mrb[0].mxu0 %v315
        %v603 = vpop.f32.mrb[0].mxu0
        %v604 = vadd.f32 %v374, %v603
        %v605 = vpop.f32.mrb[0].mxu0
        %v606 = vadd.f32 %v378, %v605
        %607 = vmatprep.mubr.f32.mxu0 0.0
        %608 = vmatmul.mubr.f32.gmra.mrb[0].mxu0 %v316
        %v609 = vpop.f32.mrb[0].mxu0
        %v610 = vadd.f32 %v374, %v609
        %v611 = vpop.f32.mrb[0].mxu0
        %v612 = vadd.f32 %v378, %v611
        %613 = vmatprep.mubr.f32.mxu0 0.0
        %614 = vmatmul.mubr.f32.gmra.mrb[0].mxu0 %v317
        %v615 = vpop.f32.mrb[0].mxu0
        %v616 = vadd.f32 %v374, %v615
        %v617 = vpop.f32.mrb[0].mxu0
        %v618 = vadd.f32 %v378, %v617
        %619 = vmatprep.mubr.f32.mxu0 0.0
        %620 = vmatmul.mubr.f32.gmra.mrb[0].mxu0 %v318
        %v621 = vpop.f32.mrb[0].mxu0
        %v622 = vadd.f32 %v374, %v621
        %v623 = vpop.f32.mrb[0].mxu0
        %v624 = vadd.f32 %v378, %v623
        %625 = vmatprep.mubr.f32.mxu0 0.0
        %626 = vmatmul.mubr.f32.gmra.mrb[0].mxu0 %v319
        %v627 = vpop.f32.mrb[0].mxu0
        %v628 = vadd.f32 %v374, %v627
        %v629 = vpop.f32.mrb[0].mxu0
        %v630 = vadd.f32 %v378, %v629
        %631 = vmatprep.mubr.f32.mxu0 0.0
        %632 = vmatmul.mubr.f32.gmra.mrb[0].mxu0 %v320
        %v633 = vpop.f32.mrb[0].mxu0
        %v634 = vadd.f32 %v374, %v633
        %v635 = vpop.f32.mrb[0].mxu0
        %v636 = vadd.f32 %v378, %v635
        %637 = vdwg.mxu0
        %v638 = vmul.f32 %v450, %v450
        %v639 = vmul.f32 %v456, %v456
        %v640 = vmul.f32 %v462, %v462
        %v641 = vmul.f32 %v468, %v468
        %v642 = vmul.f32 %v474, %v474
        %v643 = vmul.f32 %v480, %v480
        %v644 = vmul.f32 %v486, %v486
        %v645 = vmul.f32 %v492, %v492
        %v646 = vmul.f32 %v498, %v498
        %v647 = vmul.f32 %v504, %v504
        %v648 = vmul.f32 %v510, %v510
        %v649 = vmul.f32 %v516, %v516
        %v650 = vmul.f32 %v522, %v522
        %v651 = vmul.f32 %v528, %v528
        %v652 = vmul.f32 %v534, %v534
        %v653 = vmul.f32 %v540, %v540
        %v654 = vmul.f32 %v546, %v546
        %v655 = vmul.f32 %v552, %v552
        %v656 = vmul.f32 %v558, %v558
        %v657 = vmul.f32 %v564, %v564
        %v658 = vmul.f32 %v570, %v570
        %v659 = vmul.f32 %v576, %v576
        %v660 = vmul.f32 %v582, %v582
        %v661 = vmul.f32 %v588, %v588
        %v662 = vmul.f32 %v594, %v594
        %v663 = vmul.f32 %v600, %v600
        %v664 = vmul.f32 %v606, %v606
        %v665 = vmul.f32 %v612, %v612
        %v666 = vmul.f32 %v618, %v618
        %v667 = vmul.f32 %v624, %v624
        %v668 = vmul.f32 %v630, %v630
        %v669 = vmul.f32 %v636, %v636
        %670 = vmatprep.subr.mxu0 0.0
        %671 = vmatpush1.msra.mxu0 %v321
        %672 = vmatprep.subr.mxu0 0.0
        %673 = vmatpush1.msra.mxu0 %v322
        %674 = vmatprep.subr.mxu0 0.0
        %675 = vmatpush1.msra.mxu0 %v323
        %676 = vmatprep.subr.mxu0 0.0
        %677 = vmatpush1.msra.mxu0 %v324
        %678 = vmatprep.subr.mxu0 0.0
        %679 = vmatpush1.msra.mxu0 %v325
        %680 = vmatprep.subr.mxu0 0.0
        %681 = vmatpush1.msra.mxu0 %v326
        %682 = vmatprep.subr.mxu0 0.0
        %683 = vmatpush1.msra.mxu0 %v327
        %684 = vmatprep.subr.mxu0 0.0
        %685 = vmatpush1.msra.mxu0 %v328
        %686 = vmatprep.subr.mxu0 0.0
        %687 = vmatpush1.msra.mxu0 %v329
        %688 = vmatprep.subr.mxu0 0.0
        %689 = vmatpush1.msra.mxu0 %v330
        %690 = vmatprep.subr.mxu0 0.0
        %691 = vmatpush1.msra.mxu0 %v331
        %692 = vmatprep.subr.mxu0 0.0
        %693 = vmatpush1.msra.mxu0 %v332
        %694 = vmatprep.subr.mxu0 0.0
        %695 = vmatpush1.msra.mxu0 %v333
        %696 = vmatprep.subr.mxu0 0.0
        %697 = vmatpush1.msra.mxu0 %v334
        %698 = vmatprep.subr.mxu0 0.0
        %699 = vmatpush1.msra.mxu0 %v335
        %700 = vmatprep.subr.mxu0 0.0
        %701 = vmatpush1.msra.mxu0 %v336
        %702 = vmatprep.subr.mxu0 0.0
        %703 = vmatpush1.msra.mxu0 0.0
        %704 = vmatprep.subr.mxu0 0.0
        %705 = vmatpush1.msra.mxu0 0.0
        %706 = vmatprep.subr.mxu0 0.0
        %707 = vmatpush1.msra.mxu0 0.0
        %708 = vmatprep.subr.mxu0 0.0
        %709 = vmatpush1.msra.mxu0 0.0
        %710 = vmatprep.subr.mxu0 0.0
        %711 = vmatpush1.msra.mxu0 0.0
        %712 = vmatprep.subr.mxu0 0.0
        %713 = vmatpush1.msra.mxu0 0.0
        %714 = vmatprep.subr.mxu0 0.0
        %715 = vmatpush1.msra.mxu0 0.0
        %716 = vmatprep.subr.mxu0 0.0
        %717 = vmatpush1.msra.mxu0 0.0
        %718 = vmatprep.subr.mxu0 0.0
        %719 = vmatpush1.msra.mxu0 0.0
        %720 = vmatprep.subr.mxu0 0.0
        %721 = vmatpush1.msra.mxu0 0.0
        %722 = vmatprep.subr.mxu0 0.0
        %723 = vmatpush1.msra.mxu0 0.0
        %724 = vmatprep.subr.mxu0 0.0
        %725 = vmatpush1.msra.mxu0 0.0
        %726 = vmatprep.subr.mxu0 0.0
        %727 = vmatpush1.msra.mxu0 0.0
        %728 = vmatprep.subr.mxu0 0.0
        %729 = vmatpush1.msra.mxu0 0.0
        %730 = vmatprep.subr.mxu0 0.0
        %731 = vmatpush1.msra.mxu0 0.0
        %732 = vmatprep.subr.mxu0 0.0
        %733 = vmatpush1.msra.mxu0 0.0
        %734 = vmatprep.mubr.f32.mxu0 0.0
        %735 = vmatmul.mubr.f32.gmra.mrb[0].mxu0 %v450
        %v736 = vpop.f32.mrb[0].mxu0
        %v737 = vadd.f32 0.0, %v736
        %v738 = vpop.f32.mrb[0].mxu0
        %739 = vmatprep.mubr.f32.mxu0 0.0
        %740 = vmatmul.mubr.f32.gmra.mrb[0].mxu0 %v456
        %v741 = vpop.f32.mrb[0].mxu0
        %v742 = vadd.f32 0.0, %v741
        %v743 = vpop.f32.mrb[0].mxu0
        %744 = vmatprep.mubr.f32.mxu0 0.0
        %745 = vmatmul.mubr.f32.gmra.mrb[0].mxu0 %v462
        %v746 = vpop.f32.mrb[0].mxu0
        %v747 = vadd.f32 0.0, %v746
        %v748 = vpop.f32.mrb[0].mxu0
        %749 = vmatprep.mubr.f32.mxu0 0.0
        %750 = vmatmul.mubr.f32.gmra.mrb[0].mxu0 %v468
        %v751 = vpop.f32.mrb[0].mxu0
        %v752 = vadd.f32 0.0, %v751
        %v753 = vpop.f32.mrb[0].mxu0
        %754 = vmatprep.mubr.f32.mxu0 0.0
        %755 = vmatmul.mubr.f32.gmra.mrb[0].mxu0 %v474
        %v756 = vpop.f32.mrb[0].mxu0
        %v757 = vadd.f32 0.0, %v756
        %v758 = vpop.f32.mrb[0].mxu0
        %759 = vmatprep.mubr.f32.mxu0 0.0
        %760 = vmatmul.mubr.f32.gmra.mrb[0].mxu0 %v480
        %v761 = vpop.f32.mrb[0].mxu0
        %v762 = vadd.f32 0.0, %v761
        %v763 = vpop.f32.mrb[0].mxu0
        %764 = vmatprep.mubr.f32.mxu0 0.0
        %765 = vmatmul.mubr.f32.gmra.mrb[0].mxu0 %v486
        %v766 = vpop.f32.mrb[0].mxu0
        %v767 = vadd.f32 0.0, %v766
        %v768 = vpop.f32.mrb[0].mxu0
        %769 = vmatprep.mubr.f32.mxu0 0.0
        %770 = vmatmul.mubr.f32.gmra.mrb[0].mxu0 %v492
        %v771 = vpop.f32.mrb[0].mxu0
        %v772 = vadd.f32 0.0, %v771
        %v773 = vpop.f32.mrb[0].mxu0
        %774 = vmatprep.mubr.f32.mxu0 0.0
        %775 = vmatmul.mubr.f32.gmra.mrb[0].mxu0 %v498
        %v776 = vpop.f32.mrb[0].mxu0
        %v777 = vadd.f32 0.0, %v776
        %v778 = vpop.f32.mrb[0].mxu0
        %779 = vmatprep.mubr.f32.mxu0 0.0
        %780 = vmatmul.mubr.f32.gmra.mrb[0].mxu0 %v504
        %v781 = vpop.f32.mrb[0].mxu0
        %v782 = vadd.f32 0.0, %v781
        %v783 = vpop.f32.mrb[0].mxu0
        %784 = vmatprep.mubr.f32.mxu0 0.0
        %785 = vmatmul.mubr.f32.gmra.mrb[0].mxu0 %v510
        %v786 = vpop.f32.mrb[0].mxu0
        %v787 = vadd.f32 0.0, %v786
        %v788 = vpop.f32.mrb[0].mxu0
        %789 = vmatprep.mubr.f32.mxu0 0.0
        %790 = vmatmul.mubr.f32.gmra.mrb[0].mxu0 %v516
        %v791 = vpop.f32.mrb[0].mxu0
        %v792 = vadd.f32 0.0, %v791
        %v793 = vpop.f32.mrb[0].mxu0
        %794 = vmatprep.mubr.f32.mxu0 0.0
        %795 = vmatmul.mubr.f32.gmra.mrb[0].mxu0 %v522
        %v796 = vpop.f32.mrb[0].mxu0
        %v797 = vadd.f32 0.0, %v796
        %v798 = vpop.f32.mrb[0].mxu0
        %799 = vmatprep.mubr.f32.mxu0 0.0
        %800 = vmatmul.mubr.f32.gmra.mrb[0].mxu0 %v528
        %v801 = vpop.f32.mrb[0].mxu0
        %v802 = vadd.f32 0.0, %v801
        %v803 = vpop.f32.mrb[0].mxu0
        %804 = vmatprep.mubr.f32.mxu0 0.0
        %805 = vmatmul.mubr.f32.gmra.mrb[0].mxu0 %v534
        %v806 = vpop.f32.mrb[0].mxu0
        %v807 = vadd.f32 0.0, %v806
        %v808 = vpop.f32.mrb[0].mxu0
        %809 = vmatprep.mubr.f32.mxu0 0.0
        %810 = vmatmul.mubr.f32.gmra.mrb[0].mxu0 %v540
        %v811 = vpop.f32.mrb[0].mxu0
        %v812 = vadd.f32 0.0, %v811
        %v813 = vpop.f32.mrb[0].mxu0
        %814 = vmatprep.mubr.f32.mxu0 0.0
        %815 = vmatmul.mubr.f32.gmra.mrb[0].mxu0 %v546
        %v816 = vpop.f32.mrb[0].mxu0
        %v817 = vadd.f32 0.0, %v816
        %v818 = vpop.f32.mrb[0].mxu0
        %819 = vmatprep.mubr.f32.mxu0 0.0
        %820 = vmatmul.mubr.f32.gmra.mrb[0].mxu0 %v552
        %v821 = vpop.f32.mrb[0].mxu0
        %v822 = vadd.f32 0.0, %v821
        %v823 = vpop.f32.mrb[0].mxu0
        %824 = vmatprep.mubr.f32.mxu0 0.0
        %825 = vmatmul.mubr.f32.gmra.mrb[0].mxu0 %v558
        %v826 = vpop.f32.mrb[0].mxu0
        %v827 = vadd.f32 0.0, %v826
        %v828 = vpop.f32.mrb[0].mxu0
        %829 = vmatprep.mubr.f32.mxu0 0.0
        %830 = vmatmul.mubr.f32.gmra.mrb[0].mxu0 %v564
        %v831 = vpop.f32.mrb[0].mxu0
        %v832 = vadd.f32 0.0, %v831
        %v833 = vpop.f32.mrb[0].mxu0
        %834 = vmatprep.mubr.f32.mxu0 0.0
        %835 = vmatmul.mubr.f32.gmra.mrb[0].mxu0 %v570
        %v836 = vpop.f32.mrb[0].mxu0
        %v837 = vadd.f32 0.0, %v836
        %v838 = vpop.f32.mrb[0].mxu0
        %839 = vmatprep.mubr.f32.mxu0 0.0
        %840 = vmatmul.mubr.f32.gmra.mrb[0].mxu0 %v576
        %v841 = vpop.f32.mrb[0].mxu0
        %v842 = vadd.f32 0.0, %v841
        %v843 = vpop.f32.mrb[0].mxu0
        %844 = vmatprep.mubr.f32.mxu0 0.0
        %845 = vmatmul.mubr.f32.gmra.mrb[0].mxu0 %v582
        %v846 = vpop.f32.mrb[0].mxu0
        %v847 = vadd.f32 0.0, %v846
        %v848 = vpop.f32.mrb[0].mxu0
        %849 = vmatprep.mubr.f32.mxu0 0.0
        %850 = vmatmul.mubr.f32.gmra.mrb[0].mxu0 %v588
        %v851 = vpop.f32.mrb[0].mxu0
        %v852 = vadd.f32 0.0, %v851
        %v853 = vpop.f32.mrb[0].mxu0
        %854 = vmatprep.mubr.f32.mxu0 0.0
        %855 = vmatmul.mubr.f32.gmra.mrb[0].mxu0 %v594
        %v856 = vpop.f32.mrb[0].mxu0
        %v857 = vadd.f32 0.0, %v856
        %v858 = vpop.f32.mrb[0].mxu0
        %859 = vmatprep.mubr.f32.mxu0 0.0
        %860 = vmatmul.mubr.f32.gmra.mrb[0].mxu0 %v600
        %v861 = vpop.f32.mrb[0].mxu0
        %v862 = vadd.f32 0.0, %v861
        %v863 = vpop.f32.mrb[0].mxu0
        %864 = vmatprep.mubr.f32.mxu0 0.0
        %865 = vmatmul.mubr.f32.gmra.mrb[0].mxu0 %v606
        %v866 = vpop.f32.mrb[0].mxu0
        %v867 = vadd.f32 0.0, %v866
        %v868 = vpop.f32.mrb[0].mxu0
        %869 = vmatprep.mubr.f32.mxu0 0.0
        %870 = vmatmul.mubr.f32.gmra.mrb[0].mxu0 %v612
        %v871 = vpop.f32.mrb[0].mxu0
        %v872 = vadd.f32 0.0, %v871
        %v873 = vpop.f32.mrb[0].mxu0
        %874 = vmatprep.mubr.f32.mxu0 0.0
        %875 = vmatmul.mubr.f32.gmra.mrb[0].mxu0 %v618
        %v876 = vpop.f32.mrb[0].mxu0
        %v877 = vadd.f32 0.0, %v876
        %v878 = vpop.f32.mrb[0].mxu0
        %879 = vmatprep.mubr.f32.mxu0 0.0
        %880 = vmatmul.mubr.f32.gmra.mrb[0].mxu0 %v624
        %v881 = vpop.f32.mrb[0].mxu0
        %v882 = vadd.f32 0.0, %v881
        %v883 = vpop.f32.mrb[0].mxu0
        %884 = vmatprep.mubr.f32.mxu0 0.0
        %885 = vmatmul.mubr.f32.gmra.mrb[0].mxu0 %v630
        %v886 = vpop.f32.mrb[0].mxu0
        %v887 = vadd.f32 0.0, %v886
        %v888 = vpop.f32.mrb[0].mxu0
        %889 = vmatprep.mubr.f32.mxu0 0.0
        %890 = vmatmul.mubr.f32.gmra.mrb[0].mxu0 %v636
        %v891 = vpop.f32.mrb[0].mxu0
        %v892 = vadd.f32 0.0, %v891
        %v893 = vpop.f32.mrb[0].mxu0
        %894 = vmatprep.mubr.f32.mxu0 0.0
        %895 = vmatmul.mubr.f32.gmra.mrb[0].mxu0 %v638
        %v896 = vpop.f32.mrb[0].mxu0
        %v897 = vadd.f32 0.0, %v896
        %v898 = vpop.f32.mrb[0].mxu0
        %899 = vmatprep.mubr.f32.mxu0 0.0
        %900 = vmatmul.mubr.f32.gmra.mrb[0].mxu0 %v639
        %v901 = vpop.f32.mrb[0].mxu0
        %v902 = vadd.f32 0.0, %v901
        %v903 = vpop.f32.mrb[0].mxu0
        %904 = vmatprep.mubr.f32.mxu0 0.0
        %905 = vmatmul.mubr.f32.gmra.mrb[0].mxu0 %v640
        %v906 = vpop.f32.mrb[0].mxu0
        %v907 = vadd.f32 0.0, %v906
        %v908 = vpop.f32.mrb[0].mxu0
        %909 = vmatprep.mubr.f32.mxu0 0.0
        %910 = vmatmul.mubr.f32.gmra.mrb[0].mxu0 %v641
        %v911 = vpop.f32.mrb[0].mxu0
        %v912 = vadd.f32 0.0, %v911
        %v913 = vpop.f32.mrb[0].mxu0
        %914 = vmatprep.mubr.f32.mxu0 0.0
        %915 = vmatmul.mubr.f32.gmra.mrb[0].mxu0 %v642
        %v916 = vpop.f32.mrb[0].mxu0
        %v917 = vadd.f32 0.0, %v916
        %v918 = vpop.f32.mrb[0].mxu0
        %919 = vmatprep.mubr.f32.mxu0 0.0
        %920 = vmatmul.mubr.f32.gmra.mrb[0].mxu0 %v643
        %v921 = vpop.f32.mrb[0].mxu0
        %v922 = vadd.f32 0.0, %v921
        %v923 = vpop.f32.mrb[0].mxu0
        %924 = vmatprep.mubr.f32.mxu0 0.0
        %925 = vmatmul.mubr.f32.gmra.mrb[0].mxu0 %v644
        %v926 = vpop.f32.mrb[0].mxu0
        %v927 = vadd.f32 0.0, %v926
        %v928 = vpop.f32.mrb[0].mxu0
        %929 = vmatprep.mubr.f32.mxu0 0.0
        %930 = vmatmul.mubr.f32.gmra.mrb[0].mxu0 %v645
        %v931 = vpop.f32.mrb[0].mxu0
        %v932 = vadd.f32 0.0, %v931
        %v933 = vpop.f32.mrb[0].mxu0
        %934 = vmatprep.mubr.f32.mxu0 0.0
        %935 = vmatmul.mubr.f32.gmra.mrb[0].mxu0 %v646
        %v936 = vpop.f32.mrb[0].mxu0
        %v937 = vadd.f32 0.0, %v936
        %v938 = vpop.f32.mrb[0].mxu0
        %939 = vmatprep.mubr.f32.mxu0 0.0
        %940 = vmatmul.mubr.f32.gmra.mrb[0].mxu0 %v647
        %v941 = vpop.f32.mrb[0].mxu0
        %v942 = vadd.f32 0.0, %v941
        %v943 = vpop.f32.mrb[0].mxu0
        %944 = vmatprep.mubr.f32.mxu0 0.0
        %945 = vmatmul.mubr.f32.gmra.mrb[0].mxu0 %v648
        %v946 = vpop.f32.mrb[0].mxu0
        %v947 = vadd.f32 0.0, %v946
        %v948 = vpop.f32.mrb[0].mxu0
        %949 = vmatprep.mubr.f32.mxu0 0.0
        %950 = vmatmul.mubr.f32.gmra.mrb[0].mxu0 %v649
        %v951 = vpop.f32.mrb[0].mxu0
        %v952 = vadd.f32 0.0, %v951
        %v953 = vpop.f32.mrb[0].mxu0
        %954 = vmatprep.mubr.f32.mxu0 0.0
        %955 = vmatmul.mubr.f32.gmra.mrb[0].mxu0 %v650
        %v956 = vpop.f32.mrb[0].mxu0
        %v957 = vadd.f32 0.0, %v956
        %v958 = vpop.f32.mrb[0].mxu0
        %959 = vmatprep.mubr.f32.mxu0 0.0
        %960 = vmatmul.mubr.f32.gmra.mrb[0].mxu0 %v651
        %v961 = vpop.f32.mrb[0].mxu0
        %v962 = vadd.f32 0.0, %v961
        %v963 = vpop.f32.mrb[0].mxu0
        %964 = vmatprep.mubr.f32.mxu0 0.0
        %965 = vmatmul.mubr.f32.gmra.mrb[0].mxu0 %v652
        %v966 = vpop.f32.mrb[0].mxu0
        %v967 = vadd.f32 0.0, %v966
        %v968 = vpop.f32.mrb[0].mxu0
        %969 = vmatprep.mubr.f32.mxu0 0.0
        %970 = vmatmul.mubr.f32.gmra.mrb[0].mxu0 %v653
        %v971 = vpop.f32.mrb[0].mxu0
        %v972 = vadd.f32 0.0, %v971
        %v973 = vpop.f32.mrb[0].mxu0
        %974 = vmatprep.mubr.f32.mxu0 0.0
        %975 = vmatmul.mubr.f32.gmra.mrb[0].mxu0 %v654
        %v976 = vpop.f32.mrb[0].mxu0
        %v977 = vadd.f32 0.0, %v976
        %v978 = vpop.f32.mrb[0].mxu0
        %979 = vmatprep.mubr.f32.mxu0 0.0
        %980 = vmatmul.mubr.f32.gmra.mrb[0].mxu0 %v655
        %v981 = vpop.f32.mrb[0].mxu0
        %v982 = vadd.f32 0.0, %v981
        %v983 = vpop.f32.mrb[0].mxu0
        %984 = vmatprep.mubr.f32.mxu0 0.0
        %985 = vmatmul.mubr.f32.gmra.mrb[0].mxu0 %v656
        %v986 = vpop.f32.mrb[0].mxu0
        %v987 = vadd.f32 0.0, %v986
        %v988 = vpop.f32.mrb[0].mxu0
        %989 = vmatprep.mubr.f32.mxu0 0.0
        %990 = vmatmul.mubr.f32.gmra.mrb[0].mxu0 %v657
        %v991 = vpop.f32.mrb[0].mxu0
        %v992 = vadd.f32 0.0, %v991
        %v993 = vpop.f32.mrb[0].mxu0
        %994 = vmatprep.mubr.f32.mxu0 0.0
        %995 = vmatmul.mubr.f32.gmra.mrb[0].mxu0 %v658
        %v996 = vpop.f32.mrb[0].mxu0
        %v997 = vadd.f32 0.0, %v996
        %v998 = vpop.f32.mrb[0].mxu0
        %999 = vmatprep.mubr.f32.mxu0 0.0
        %1000 = vmatmul.mubr.f32.gmra.mrb[0].mxu0 %v659
        %v1001 = vpop.f32.mrb[0].mxu0
        %v1002 = vadd.f32 0.0, %v1001
        %v1003 = vpop.f32.mrb[0].mxu0
        %1004 = vmatprep.mubr.f32.mxu0 0.0
        %1005 = vmatmul.mubr.f32.gmra.mrb[0].mxu0 %v660
        %v1006 = vpop.f32.mrb[0].mxu0
        %v1007 = vadd.f32 0.0, %v1006
        %v1008 = vpop.f32.mrb[0].mxu0
        %1009 = vmatprep.mubr.f32.mxu0 0.0
        %1010 = vmatmul.mubr.f32.gmra.mrb[0].mxu0 %v661
        %v1011 = vpop.f32.mrb[0].mxu0
        %v1012 = vadd.f32 0.0, %v1011
        %v1013 = vpop.f32.mrb[0].mxu0
        %1014 = vmatprep.mubr.f32.mxu0 0.0
        %1015 = vmatmul.mubr.f32.gmra.mrb[0].mxu0 %v662
        %v1016 = vpop.f32.mrb[0].mxu0
        %v1017 = vadd.f32 0.0, %v1016
        %v1018 = vpop.f32.mrb[0].mxu0
        %1019 = vmatprep.mubr.f32.mxu0 0.0
        %1020 = vmatmul.mubr.f32.gmra.mrb[0].mxu0 %v663
        %v1021 = vpop.f32.mrb[0].mxu0
        %v1022 = vadd.f32 0.0, %v1021
        %v1023 = vpop.f32.mrb[0].mxu0
        %1024 = vmatprep.mubr.f32.mxu0 0.0
        %1025 = vmatmul.mubr.f32.gmra.mrb[0].mxu0 %v664
        %v1026 = vpop.f32.mrb[0].mxu0
        %v1027 = vadd.f32 0.0, %v1026
        %v1028 = vpop.f32.mrb[0].mxu0
        %1029 = vmatprep.mubr.f32.mxu0 0.0
        %1030 = vmatmul.mubr.f32.gmra.mrb[0].mxu0 %v665
        %v1031 = vpop.f32.mrb[0].mxu0
        %v1032 = vadd.f32 0.0, %v1031
        %v1033 = vpop.f32.mrb[0].mxu0
        %1034 = vmatprep.mubr.f32.mxu0 0.0
        %1035 = vmatmul.mubr.f32.gmra.mrb[0].mxu0 %v666
        %v1036 = vpop.f32.mrb[0].mxu0
        %v1037 = vadd.f32 0.0, %v1036
        %v1038 = vpop.f32.mrb[0].mxu0
        %1039 = vmatprep.mubr.f32.mxu0 0.0
        %1040 = vmatmul.mubr.f32.gmra.mrb[0].mxu0 %v667
        %v1041 = vpop.f32.mrb[0].mxu0
        %v1042 = vadd.f32 0.0, %v1041
        %v1043 = vpop.f32.mrb[0].mxu0
        %1044 = vmatprep.mubr.f32.mxu0 0.0
        %1045 = vmatmul.mubr.f32.gmra.mrb[0].mxu0 %v668
        %v1046 = vpop.f32.mrb[0].mxu0
        %v1047 = vadd.f32 0.0, %v1046
        %v1048 = vpop.f32.mrb[0].mxu0
        %1049 = vmatprep.mubr.f32.mxu0 0.0
        %1050 = vmatmul.mubr.f32.gmra.mrb[0].mxu0 %v669
        %v1051 = vpop.f32.mrb[0].mxu0
        %v1052 = vadd.f32 0.0, %v1051
        %v1053 = vpop.f32.mrb[0].mxu0
        %1054 = vdwg.mxu0
        %v1055 = vmul.f32 %v737, 0.0625
        %v1056 = vmul.f32 %v742, 0.0625
        %v1057 = vmul.f32 %v747, 0.0625
        %v1058 = vmul.f32 %v752, 0.0625
        %v1059 = vmul.f32 %v757, 0.0625
        %v1060 = vmul.f32 %v762, 0.0625
        %v1061 = vmul.f32 %v767, 0.0625
        %v1062 = vmul.f32 %v772, 0.0625
        %v1063 = vmul.f32 %v777, 0.0625
        %v1064 = vmul.f32 %v782, 0.0625
        %v1065 = vmul.f32 %v787, 0.0625
        %v1066 = vmul.f32 %v792, 0.0625
        %v1067 = vmul.f32 %v797, 0.0625
        %v1068 = vmul.f32 %v802, 0.0625
        %v1069 = vmul.f32 %v807, 0.0625
        %v1070 = vmul.f32 %v812, 0.0625
        %v1071 = vmul.f32 %v817, 0.0625
        %v1072 = vmul.f32 %v822, 0.0625
        %v1073 = vmul.f32 %v827, 0.0625
        %v1074 = vmul.f32 %v832, 0.0625
        %v1075 = vmul.f32 %v837, 0.0625
        %v1076 = vmul.f32 %v842, 0.0625
        %v1077 = vmul.f32 %v847, 0.0625
        %v1078 = vmul.f32 %v852, 0.0625
        %v1079 = vmul.f32 %v857, 0.0625
        %v1080 = vmul.f32 %v862, 0.0625
        %v1081 = vmul.f32 %v867, 0.0625
        %v1082 = vmul.f32 %v872, 0.0625
        %v1083 = vmul.f32 %v877, 0.0625
        %v1084 = vmul.f32 %v882, 0.0625
        %v1085 = vmul.f32 %v887, 0.0625
        %v1086 = vmul.f32 %v892, 0.0625
        %v1087 = vmul.f32 %v897, 0.0625
        %v1088 = vmul.f32 %v902, 0.0625
        %v1089 = vmul.f32 %v907, 0.0625
        %v1090 = vmul.f32 %v912, 0.0625
        %v1091 = vmul.f32 %v917, 0.0625
        %v1092 = vmul.f32 %v922, 0.0625
        %v1093 = vmul.f32 %v927, 0.0625
        %v1094 = vmul.f32 %v932, 0.0625
        %v1095 = vmul.f32 %v937, 0.0625
        %v1096 = vmul.f32 %v942, 0.0625
        %v1097 = vmul.f32 %v947, 0.0625
        %v1098 = vmul.f32 %v952, 0.0625
        %v1099 = vmul.f32 %v957, 0.0625
        %v1100 = vmul.f32 %v962, 0.0625
        %v1101 = vmul.f32 %v967, 0.0625
        %v1102 = vmul.f32 %v972, 0.0625
        %v1103 = vmul.f32 %v977, 0.0625
        %v1104 = vmul.f32 %v982, 0.0625
        %v1105 = vmul.f32 %v987, 0.0625
        %v1106 = vmul.f32 %v992, 0.0625
        %v1107 = vmul.f32 %v997, 0.0625
        %v1108 = vmul.f32 %v1002, 0.0625
        %v1109 = vmul.f32 %v1007, 0.0625
        %v1110 = vmul.f32 %v1012, 0.0625
        %v1111 = vmul.f32 %v1017, 0.0625
        %v1112 = vmul.f32 %v1022, 0.0625
        %v1113 = vmul.f32 %v1027, 0.0625
        %v1114 = vmul.f32 %v1032, 0.0625
        %v1115 = vmul.f32 %v1037, 0.0625
        %v1116 = vmul.f32 %v1042, 0.0625
        %v1117 = vmul.f32 %v1047, 0.0625
        %v1118 = vmul.f32 %v1052, 0.0625
        %v1119 = vmul.f32 %v1055, %v1055
        %v1120 = vmul.f32 %v1056, %v1056
        %v1121 = vmul.f32 %v1057, %v1057
        %v1122 = vmul.f32 %v1058, %v1058
        %v1123 = vmul.f32 %v1059, %v1059
        %v1124 = vmul.f32 %v1060, %v1060
        %v1125 = vmul.f32 %v1061, %v1061
        %v1126 = vmul.f32 %v1062, %v1062
        %v1127 = vmul.f32 %v1063, %v1063
        %v1128 = vmul.f32 %v1064, %v1064
        %v1129 = vmul.f32 %v1065, %v1065
        %v1130 = vmul.f32 %v1066, %v1066
        %v1131 = vmul.f32 %v1067, %v1067
        %v1132 = vmul.f32 %v1068, %v1068
        %v1133 = vmul.f32 %v1069, %v1069
        %v1134 = vmul.f32 %v1070, %v1070
        %v1135 = vmul.f32 %v1071, %v1071
        %v1136 = vmul.f32 %v1072, %v1072
        %v1137 = vmul.f32 %v1073, %v1073
        %v1138 = vmul.f32 %v1074, %v1074
        %v1139 = vmul.f32 %v1075, %v1075
        %v1140 = vmul.f32 %v1076, %v1076
        %v1141 = vmul.f32 %v1077, %v1077
        %v1142 = vmul.f32 %v1078, %v1078
        %v1143 = vmul.f32 %v1079, %v1079
        %v1144 = vmul.f32 %v1080, %v1080
        %v1145 = vmul.f32 %v1081, %v1081
        %v1146 = vmul.f32 %v1082, %v1082
        %v1147 = vmul.f32 %v1083, %v1083
        %v1148 = vmul.f32 %v1084, %v1084
        %v1149 = vmul.f32 %v1085, %v1085
        %v1150 = vmul.f32 %v1086, %v1086
        %v1151 = vsub.f32 %v1087, %v1119
        %v1152 = vsub.f32 %v1088, %v1120
        %v1153 = vsub.f32 %v1089, %v1121
        %v1154 = vsub.f32 %v1090, %v1122
        %v1155 = vsub.f32 %v1091, %v1123
        %v1156 = vsub.f32 %v1092, %v1124
        %v1157 = vsub.f32 %v1093, %v1125
        %v1158 = vsub.f32 %v1094, %v1126
        %v1159 = vsub.f32 %v1095, %v1127
        %v1160 = vsub.f32 %v1096, %v1128
        %v1161 = vsub.f32 %v1097, %v1129
        %v1162 = vsub.f32 %v1098, %v1130
        %v1163 = vsub.f32 %v1099, %v1131
        %v1164 = vsub.f32 %v1100, %v1132
        %v1165 = vsub.f32 %v1101, %v1133
        %v1166 = vsub.f32 %v1102, %v1134
        %v1167 = vsub.f32 %v1103, %v1135
        %v1168 = vsub.f32 %v1104, %v1136
        %v1169 = vsub.f32 %v1105, %v1137
        %v1170 = vsub.f32 %v1106, %v1138
        %v1171 = vsub.f32 %v1107, %v1139
        %v1172 = vsub.f32 %v1108, %v1140
        %v1173 = vsub.f32 %v1109, %v1141
        %v1174 = vsub.f32 %v1110, %v1142
        %v1175 = vsub.f32 %v1111, %v1143
        %v1176 = vsub.f32 %v1112, %v1144
        %v1177 = vsub.f32 %v1113, %v1145
        %v1178 = vsub.f32 %v1114, %v1146
        %v1179 = vsub.f32 %v1115, %v1147
        %v1180 = vsub.f32 %v1116, %v1148
        %v1181 = vsub.f32 %v1117, %v1149
        %v1182 = vsub.f32 %v1118, %v1150
        %v1183 = vmax.f32 %v1151, 0.0
        %v1184 = vmax.f32 %v1152, 0.0
        %v1185 = vmax.f32 %v1153, 0.0
        %v1186 = vmax.f32 %v1154, 0.0
        %v1187 = vmax.f32 %v1155, 0.0
        %v1188 = vmax.f32 %v1156, 0.0
        %v1189 = vmax.f32 %v1157, 0.0
        %v1190 = vmax.f32 %v1158, 0.0
        %v1191 = vmax.f32 %v1159, 0.0
        %v1192 = vmax.f32 %v1160, 0.0
        %v1193 = vmax.f32 %v1161, 0.0
        %v1194 = vmax.f32 %v1162, 0.0
        %v1195 = vmax.f32 %v1163, 0.0
        %v1196 = vmax.f32 %v1164, 0.0
        %v1197 = vmax.f32 %v1165, 0.0
        %v1198 = vmax.f32 %v1166, 0.0
        %v1199 = vmax.f32 %v1167, 0.0
        %v1200 = vmax.f32 %v1168, 0.0
        %v1201 = vmax.f32 %v1169, 0.0
        %v1202 = vmax.f32 %v1170, 0.0
        %v1203 = vmax.f32 %v1171, 0.0
        %v1204 = vmax.f32 %v1172, 0.0
        %v1205 = vmax.f32 %v1173, 0.0
        %v1206 = vmax.f32 %v1174, 0.0
        %v1207 = vmax.f32 %v1175, 0.0
        %v1208 = vmax.f32 %v1176, 0.0
        %v1209 = vmax.f32 %v1177, 0.0
        %v1210 = vmax.f32 %v1178, 0.0
        %v1211 = vmax.f32 %v1179, 0.0
        %v1212 = vmax.f32 %v1180, 0.0
        %v1213 = vmax.f32 %v1181, 0.0
        %v1214 = vmax.f32 %v1182, 0.0
        %v1215 = vadd.f32 %v1183, 1e-05
        %v1216 = vadd.f32 %v1184, 1e-05
        %v1217 = vadd.f32 %v1185, 1e-05
        %v1218 = vadd.f32 %v1186, 1e-05
        %v1219 = vadd.f32 %v1187, 1e-05
        %v1220 = vadd.f32 %v1188, 1e-05
        %v1221 = vadd.f32 %v1189, 1e-05
        %v1222 = vadd.f32 %v1190, 1e-05
        %v1223 = vadd.f32 %v1191, 1e-05
        %v1224 = vadd.f32 %v1192, 1e-05
        %v1225 = vadd.f32 %v1193, 1e-05
        %v1226 = vadd.f32 %v1194, 1e-05
        %v1227 = vadd.f32 %v1195, 1e-05
        %v1228 = vadd.f32 %v1196, 1e-05
        %v1229 = vadd.f32 %v1197, 1e-05
        %v1230 = vadd.f32 %v1198, 1e-05
        %v1231 = vadd.f32 %v1199, 1e-05
        %v1232 = vadd.f32 %v1200, 1e-05
        %v1233 = vadd.f32 %v1201, 1e-05
        %v1234 = vadd.f32 %v1202, 1e-05
        %v1235 = vadd.f32 %v1203, 1e-05
        %v1236 = vadd.f32 %v1204, 1e-05
        %v1237 = vadd.f32 %v1205, 1e-05
        %v1238 = vadd.f32 %v1206, 1e-05
        %v1239 = vadd.f32 %v1207, 1e-05
        %v1240 = vadd.f32 %v1208, 1e-05
        %v1241 = vadd.f32 %v1209, 1e-05
        %v1242 = vadd.f32 %v1210, 1e-05
        %v1243 = vadd.f32 %v1211, 1e-05
        %v1244 = vadd.f32 %v1212, 1e-05
        %v1245 = vadd.f32 %v1213, 1e-05
        %v1246 = vadd.f32 %v1214, 1e-05
        %v1247 = vrsqrt.pop %v1215
        %v1248 = vrsqrt.pop %v1216
        %v1249 = vrsqrt.pop %v1217
        %v1250 = vrsqrt.pop %v1218
        %v1251 = vrsqrt.pop %v1219
        %v1252 = vrsqrt.pop %v1220
        %v1253 = vrsqrt.pop %v1221
        %v1254 = vrsqrt.pop %v1222
        %v1255 = vrsqrt.pop %v1223
        %v1256 = vrsqrt.pop %v1224
        %v1257 = vrsqrt.pop %v1225
        %v1258 = vrsqrt.pop %v1226
        %v1259 = vrsqrt.pop %v1227
        %v1260 = vrsqrt.pop %v1228
        %v1261 = vrsqrt.pop %v1229
        %v1262 = vrsqrt.pop %v1230
        %v1263 = vrsqrt.pop %v1231
        %v1264 = vrsqrt.pop %v1232
        %v1265 = vrsqrt.pop %v1233
        %v1266 = vrsqrt.pop %v1234
        %v1267 = vrsqrt.pop %v1235
        %v1268 = vrsqrt.pop %v1236
        %v1269 = vrsqrt.pop %v1237
        %v1270 = vrsqrt.pop %v1238
        %v1271 = vrsqrt.pop %v1239
        %v1272 = vrsqrt.pop %v1240
        %v1273 = vrsqrt.pop %v1241
        %v1274 = vrsqrt.pop %v1242
        %v1275 = vrsqrt.pop %v1243
        %v1276 = vrsqrt.pop %v1244
        %v1277 = vrsqrt.pop %v1245
        %v1278 = vrsqrt.pop %v1246
        %1279 = vmatprep.subr.mxu0 0.0
        %1280 = vmatpush1.xpose.msra.mxu0 %v321
        %1281 = vmatprep.subr.mxu0 0.0
        %1282 = vmatpush1.xpose.msra.mxu0 %v322
        %1283 = vmatprep.subr.mxu0 0.0
        %1284 = vmatpush1.xpose.msra.mxu0 %v323
        %1285 = vmatprep.subr.mxu0 0.0
        %1286 = vmatpush1.xpose.msra.mxu0 %v324
        %1287 = vmatprep.subr.mxu0 0.0
        %1288 = vmatpush1.xpose.msra.mxu0 %v325
        %1289 = vmatprep.subr.mxu0 0.0
        %1290 = vmatpush1.xpose.msra.mxu0 %v326
        %1291 = vmatprep.subr.mxu0 0.0
        %1292 = vmatpush1.xpose.msra.mxu0 %v327
        %1293 = vmatprep.subr.mxu0 0.0
        %1294 = vmatpush1.xpose.msra.mxu0 %v328
        %1295 = vmatprep.subr.mxu0 0.0
        %1296 = vmatpush1.xpose.msra.mxu0 %v329
        %1297 = vmatprep.subr.mxu0 0.0
        %1298 = vmatpush1.xpose.msra.mxu0 %v330
        %1299 = vmatprep.subr.mxu0 0.0
        %1300 = vmatpush1.xpose.msra.mxu0 %v331
        %1301 = vmatprep.subr.mxu0 0.0
        %1302 = vmatpush1.xpose.msra.mxu0 %v332
        %1303 = vmatprep.subr.mxu0 0.0
        %1304 = vmatpush1.xpose.msra.mxu0 %v333
        %1305 = vmatprep.subr.mxu0 0.0
        %1306 = vmatpush1.xpose.msra.mxu0 %v334
        %1307 = vmatprep.subr.mxu0 0.0
        %1308 = vmatpush1.xpose.msra.mxu0 %v335
        %1309 = vmatprep.subr.mxu0 0.0
        %1310 = vmatpush1.xpose.msra.mxu0 %v336
        %1311 = vmatprep.subr.mxu0 0.0
        %1312 = vmatpush1.xpose.msra.mxu0 0.0
        %1313 = vmatprep.subr.mxu0 0.0
        %1314 = vmatpush1.xpose.msra.mxu0 0.0
        %1315 = vmatprep.subr.mxu0 0.0
        %1316 = vmatpush1.xpose.msra.mxu0 0.0
        %1317 = vmatprep.subr.mxu0 0.0
        %1318 = vmatpush1.xpose.msra.mxu0 0.0
        %1319 = vmatprep.subr.mxu0 0.0
        %1320 = vmatpush1.xpose.msra.mxu0 0.0
        %1321 = vmatprep.subr.mxu0 0.0
        %1322 = vmatpush1.xpose.msra.mxu0 0.0
        %1323 = vmatprep.subr.mxu0 0.0
        %1324 = vmatpush1.xpose.msra.mxu0 0.0
        %1325 = vmatprep.subr.mxu0 0.0
        %1326 = vmatpush1.xpose.msra.mxu0 0.0
        %1327 = vmatprep.subr.mxu0 0.0
        %1328 = vmatpush1.xpose.msra.mxu0 0.0
        %1329 = vmatprep.subr.mxu0 0.0
        %1330 = vmatpush1.xpose.msra.mxu0 0.0
        %1331 = vmatprep.subr.mxu0 0.0
        %1332 = vmatpush1.xpose.msra.mxu0 0.0
        %1333 = vmatprep.subr.mxu0 0.0
        %1334 = vmatpush1.xpose.msra.mxu0 0.0
        %1335 = vmatprep.subr.mxu0 0.0
        %1336 = vmatpush1.xpose.msra.mxu0 0.0
        %1337 = vmatprep.subr.mxu0 0.0
        %1338 = vmatpush1.xpose.msra.mxu0 0.0
        %1339 = vmatprep.subr.mxu0 0.0
        %1340 = vmatpush1.xpose.msra.mxu0 0.0
        %1341 = vmatprep.subr.mxu0 0.0
        %1342 = vmatpush1.xpose.msra.mxu0 0.0
        %1343 = vmatprep.mubr.f32.mxu0 0.0
        %1344 = vmatmul.mubr.f32.gmra.mrb[0].mxu0 %v1055
        %v1345 = vpop.f32.mrb[0].mxu0
        %v1346 = vadd.f32 0.0, %v1345
        %v1347 = vpop.f32.mrb[0].mxu0
        %1348 = vmatprep.mubr.f32.mxu0 0.0
        %1349 = vmatmul.mubr.f32.gmra.mrb[0].mxu0 %v1056
        %v1350 = vpop.f32.mrb[0].mxu0
        %v1351 = vadd.f32 0.0, %v1350
        %v1352 = vpop.f32.mrb[0].mxu0
        %1353 = vmatprep.mubr.f32.mxu0 0.0
        %1354 = vmatmul.mubr.f32.gmra.mrb[0].mxu0 %v1057
        %v1355 = vpop.f32.mrb[0].mxu0
        %v1356 = vadd.f32 0.0, %v1355
        %v1357 = vpop.f32.mrb[0].mxu0
        %1358 = vmatprep.mubr.f32.mxu0 0.0
        %1359 = vmatmul.mubr.f32.gmra.mrb[0].mxu0 %v1058
        %v1360 = vpop.f32.mrb[0].mxu0
        %v1361 = vadd.f32 0.0, %v1360
        %v1362 = vpop.f32.mrb[0].mxu0
        %1363 = vmatprep.mubr.f32.mxu0 0.0
        %1364 = vmatmul.mubr.f32.gmra.mrb[0].mxu0 %v1059
        %v1365 = vpop.f32.mrb[0].mxu0
        %v1366 = vadd.f32 0.0, %v1365
        %v1367 = vpop.f32.mrb[0].mxu0
        %1368 = vmatprep.mubr.f32.mxu0 0.0
        %1369 = vmatmul.mubr.f32.gmra.mrb[0].mxu0 %v1060
        %v1370 = vpop.f32.mrb[0].mxu0
        %v1371 = vadd.f32 0.0, %v1370
        %v1372 = vpop.f32.mrb[0].mxu0
        %1373 = vmatprep.mubr.f32.mxu0 0.0
        %1374 = vmatmul.mubr.f32.gmra.mrb[0].mxu0 %v1061
        %v1375 = vpop.f32.mrb[0].mxu0
        %v1376 = vadd.f32 0.0, %v1375
        %v1377 = vpop.f32.mrb[0].mxu0
        %1378 = vmatprep.mubr.f32.mxu0 0.0
        %1379 = vmatmul.mubr.f32.gmra.mrb[0].mxu0 %v1062
        %v1380 = vpop.f32.mrb[0].mxu0
        %v1381 = vadd.f32 0.0, %v1380
        %v1382 = vpop.f32.mrb[0].mxu0
        %1383 = vmatprep.mubr.f32.mxu0 0.0
        %1384 = vmatmul.mubr.f32.gmra.mrb[0].mxu0 %v1063
        %v1385 = vpop.f32.mrb[0].mxu0
        %v1386 = vadd.f32 0.0, %v1385
        %v1387 = vpop.f32.mrb[0].mxu0
        %1388 = vmatprep.mubr.f32.mxu0 0.0
        %1389 = vmatmul.mubr.f32.gmra.mrb[0].mxu0 %v1064
        %v1390 = vpop.f32.mrb[0].mxu0
        %v1391 = vadd.f32 0.0, %v1390
        %v1392 = vpop.f32.mrb[0].mxu0
        %1393 = vmatprep.mubr.f32.mxu0 0.0
        %1394 = vmatmul.mubr.f32.gmra.mrb[0].mxu0 %v1065
        %v1395 = vpop.f32.mrb[0].mxu0
        %v1396 = vadd.f32 0.0, %v1395
        %v1397 = vpop.f32.mrb[0].mxu0
        %1398 = vmatprep.mubr.f32.mxu0 0.0
        %1399 = vmatmul.mubr.f32.gmra.mrb[0].mxu0 %v1066
        %v1400 = vpop.f32.mrb[0].mxu0
        %v1401 = vadd.f32 0.0, %v1400
        %v1402 = vpop.f32.mrb[0].mxu0
        %1403 = vmatprep.mubr.f32.mxu0 0.0
        %1404 = vmatmul.mubr.f32.gmra.mrb[0].mxu0 %v1067
        %v1405 = vpop.f32.mrb[0].mxu0
        %v1406 = vadd.f32 0.0, %v1405
        %v1407 = vpop.f32.mrb[0].mxu0
        %1408 = vmatprep.mubr.f32.mxu0 0.0
        %1409 = vmatmul.mubr.f32.gmra.mrb[0].mxu0 %v1068
        %v1410 = vpop.f32.mrb[0].mxu0
        %v1411 = vadd.f32 0.0, %v1410
        %v1412 = vpop.f32.mrb[0].mxu0
        %1413 = vmatprep.mubr.f32.mxu0 0.0
        %1414 = vmatmul.mubr.f32.gmra.mrb[0].mxu0 %v1069
        %v1415 = vpop.f32.mrb[0].mxu0
        %v1416 = vadd.f32 0.0, %v1415
        %v1417 = vpop.f32.mrb[0].mxu0
        %1418 = vmatprep.mubr.f32.mxu0 0.0
        %1419 = vmatmul.mubr.f32.gmra.mrb[0].mxu0 %v1070
        %v1420 = vpop.f32.mrb[0].mxu0
        %v1421 = vadd.f32 0.0, %v1420
        %v1422 = vpop.f32.mrb[0].mxu0
        %1423 = vmatprep.mubr.f32.mxu0 0.0
        %1424 = vmatmul.mubr.f32.gmra.mrb[0].mxu0 %v1071
        %v1425 = vpop.f32.mrb[0].mxu0
        %v1426 = vadd.f32 0.0, %v1425
        %v1427 = vpop.f32.mrb[0].mxu0
        %1428 = vmatprep.mubr.f32.mxu0 0.0
        %1429 = vmatmul.mubr.f32.gmra.mrb[0].mxu0 %v1072
        %v1430 = vpop.f32.mrb[0].mxu0
        %v1431 = vadd.f32 0.0, %v1430
        %v1432 = vpop.f32.mrb[0].mxu0
        %1433 = vmatprep.mubr.f32.mxu0 0.0
        %1434 = vmatmul.mubr.f32.gmra.mrb[0].mxu0 %v1073
        %v1435 = vpop.f32.mrb[0].mxu0
        %v1436 = vadd.f32 0.0, %v1435
        %v1437 = vpop.f32.mrb[0].mxu0
        %1438 = vmatprep.mubr.f32.mxu0 0.0
        %1439 = vmatmul.mubr.f32.gmra.mrb[0].mxu0 %v1074
        %v1440 = vpop.f32.mrb[0].mxu0
        %v1441 = vadd.f32 0.0, %v1440
        %v1442 = vpop.f32.mrb[0].mxu0
        %1443 = vmatprep.mubr.f32.mxu0 0.0
        %1444 = vmatmul.mubr.f32.gmra.mrb[0].mxu0 %v1075
        %v1445 = vpop.f32.mrb[0].mxu0
        %v1446 = vadd.f32 0.0, %v1445
        %v1447 = vpop.f32.mrb[0].mxu0
        %1448 = vmatprep.mubr.f32.mxu0 0.0
        %1449 = vmatmul.mubr.f32.gmra.mrb[0].mxu0 %v1076
        %v1450 = vpop.f32.mrb[0].mxu0
        %v1451 = vadd.f32 0.0, %v1450
        %v1452 = vpop.f32.mrb[0].mxu0
        %1453 = vmatprep.mubr.f32.mxu0 0.0
        %1454 = vmatmul.mubr.f32.gmra.mrb[0].mxu0 %v1077
        %v1455 = vpop.f32.mrb[0].mxu0
        %v1456 = vadd.f32 0.0, %v1455
        %v1457 = vpop.f32.mrb[0].mxu0
        %1458 = vmatprep.mubr.f32.mxu0 0.0
        %1459 = vmatmul.mubr.f32.gmra.mrb[0].mxu0 %v1078
        %v1460 = vpop.f32.mrb[0].mxu0
        %v1461 = vadd.f32 0.0, %v1460
        %v1462 = vpop.f32.mrb[0].mxu0
        %1463 = vmatprep.mubr.f32.mxu0 0.0
        %1464 = vmatmul.mubr.f32.gmra.mrb[0].mxu0 %v1079
        %v1465 = vpop.f32.mrb[0].mxu0
        %v1466 = vadd.f32 0.0, %v1465
        %v1467 = vpop.f32.mrb[0].mxu0
        %1468 = vmatprep.mubr.f32.mxu0 0.0
        %1469 = vmatmul.mubr.f32.gmra.mrb[0].mxu0 %v1080
        %v1470 = vpop.f32.mrb[0].mxu0
        %v1471 = vadd.f32 0.0, %v1470
        %v1472 = vpop.f32.mrb[0].mxu0
        %1473 = vmatprep.mubr.f32.mxu0 0.0
        %1474 = vmatmul.mubr.f32.gmra.mrb[0].mxu0 %v1081
        %v1475 = vpop.f32.mrb[0].mxu0
        %v1476 = vadd.f32 0.0, %v1475
        %v1477 = vpop.f32.mrb[0].mxu0
        %1478 = vmatprep.mubr.f32.mxu0 0.0
        %1479 = vmatmul.mubr.f32.gmra.mrb[0].mxu0 %v1082
        %v1480 = vpop.f32.mrb[0].mxu0
        %v1481 = vadd.f32 0.0, %v1480
        %v1482 = vpop.f32.mrb[0].mxu0
        %1483 = vmatprep.mubr.f32.mxu0 0.0
        %1484 = vmatmul.mubr.f32.gmra.mrb[0].mxu0 %v1083
        %v1485 = vpop.f32.mrb[0].mxu0
        %v1486 = vadd.f32 0.0, %v1485
        %v1487 = vpop.f32.mrb[0].mxu0
        %1488 = vmatprep.mubr.f32.mxu0 0.0
        %1489 = vmatmul.mubr.f32.gmra.mrb[0].mxu0 %v1084
        %v1490 = vpop.f32.mrb[0].mxu0
        %v1491 = vadd.f32 0.0, %v1490
        %v1492 = vpop.f32.mrb[0].mxu0
        %1493 = vmatprep.mubr.f32.mxu0 0.0
        %1494 = vmatmul.mubr.f32.gmra.mrb[0].mxu0 %v1085
        %v1495 = vpop.f32.mrb[0].mxu0
        %v1496 = vadd.f32 0.0, %v1495
        %v1497 = vpop.f32.mrb[0].mxu0
        %1498 = vmatprep.mubr.f32.mxu0 0.0
        %1499 = vmatmul.mubr.f32.gmra.mrb[0].mxu0 %v1086
        %v1500 = vpop.f32.mrb[0].mxu0
        %v1501 = vadd.f32 0.0, %v1500
        %v1502 = vpop.f32.mrb[0].mxu0
        %1503 = vmatprep.mubr.f32.mxu0 0.0
        %1504 = vmatmul.mubr.f32.gmra.mrb[0].mxu0 %v1247
        %v1505 = vpop.f32.mrb[0].mxu0
        %v1506 = vadd.f32 0.0, %v1505
        %v1507 = vpop.f32.mrb[0].mxu0
        %1508 = vmatprep.mubr.f32.mxu0 0.0
        %1509 = vmatmul.mubr.f32.gmra.mrb[0].mxu0 %v1248
        %v1510 = vpop.f32.mrb[0].mxu0
        %v1511 = vadd.f32 0.0, %v1510
        %v1512 = vpop.f32.mrb[0].mxu0
        %1513 = vmatprep.mubr.f32.mxu0 0.0
        %1514 = vmatmul.mubr.f32.gmra.mrb[0].mxu0 %v1249
        %v1515 = vpop.f32.mrb[0].mxu0
        %v1516 = vadd.f32 0.0, %v1515
        %v1517 = vpop.f32.mrb[0].mxu0
        %1518 = vmatprep.mubr.f32.mxu0 0.0
        %1519 = vmatmul.mubr.f32.gmra.mrb[0].mxu0 %v1250
        %v1520 = vpop.f32.mrb[0].mxu0
        %v1521 = vadd.f32 0.0, %v1520
        %v1522 = vpop.f32.mrb[0].mxu0
        %1523 = vmatprep.mubr.f32.mxu0 0.0
        %1524 = vmatmul.mubr.f32.gmra.mrb[0].mxu0 %v1251
        %v1525 = vpop.f32.mrb[0].mxu0
        %v1526 = vadd.f32 0.0, %v1525
        %v1527 = vpop.f32.mrb[0].mxu0
        %1528 = vmatprep.mubr.f32.mxu0 0.0
        %1529 = vmatmul.mubr.f32.gmra.mrb[0].mxu0 %v1252
        %v1530 = vpop.f32.mrb[0].mxu0
        %v1531 = vadd.f32 0.0, %v1530
        %v1532 = vpop.f32.mrb[0].mxu0
        %1533 = vmatprep.mubr.f32.mxu0 0.0
        %1534 = vmatmul.mubr.f32.gmra.mrb[0].mxu0 %v1253
        %v1535 = vpop.f32.mrb[0].mxu0
        %v1536 = vadd.f32 0.0, %v1535
        %v1537 = vpop.f32.mrb[0].mxu0
        %1538 = vmatprep.mubr.f32.mxu0 0.0
        %1539 = vmatmul.mubr.f32.gmra.mrb[0].mxu0 %v1254
        %v1540 = vpop.f32.mrb[0].mxu0
        %v1541 = vadd.f32 0.0, %v1540
        %v1542 = vpop.f32.mrb[0].mxu0
        %1543 = vmatprep.mubr.f32.mxu0 0.0
        %1544 = vmatmul.mubr.f32.gmra.mrb[0].mxu0 %v1255
        %v1545 = vpop.f32.mrb[0].mxu0
        %v1546 = vadd.f32 0.0, %v1545
        %v1547 = vpop.f32.mrb[0].mxu0
        %1548 = vmatprep.mubr.f32.mxu0 0.0
        %1549 = vmatmul.mubr.f32.gmra.mrb[0].mxu0 %v1256
        %v1550 = vpop.f32.mrb[0].mxu0
        %v1551 = vadd.f32 0.0, %v1550
        %v1552 = vpop.f32.mrb[0].mxu0
        %1553 = vmatprep.mubr.f32.mxu0 0.0
        %1554 = vmatmul.mubr.f32.gmra.mrb[0].mxu0 %v1257
        %v1555 = vpop.f32.mrb[0].mxu0
        %v1556 = vadd.f32 0.0, %v1555
        %v1557 = vpop.f32.mrb[0].mxu0
        %1558 = vmatprep.mubr.f32.mxu0 0.0
        %1559 = vmatmul.mubr.f32.gmra.mrb[0].mxu0 %v1258
        %v1560 = vpop.f32.mrb[0].mxu0
        %v1561 = vadd.f32 0.0, %v1560
        %v1562 = vpop.f32.mrb[0].mxu0
        %1563 = vmatprep.mubr.f32.mxu0 0.0
        %1564 = vmatmul.mubr.f32.gmra.mrb[0].mxu0 %v1259
        %v1565 = vpop.f32.mrb[0].mxu0
        %v1566 = vadd.f32 0.0, %v1565
        %v1567 = vpop.f32.mrb[0].mxu0
        %1568 = vmatprep.mubr.f32.mxu0 0.0
        %1569 = vmatmul.mubr.f32.gmra.mrb[0].mxu0 %v1260
        %v1570 = vpop.f32.mrb[0].mxu0
        %v1571 = vadd.f32 0.0, %v1570
        %v1572 = vpop.f32.mrb[0].mxu0
        %1573 = vmatprep.mubr.f32.mxu0 0.0
        %1574 = vmatmul.mubr.f32.gmra.mrb[0].mxu0 %v1261
        %v1575 = vpop.f32.mrb[0].mxu0
        %v1576 = vadd.f32 0.0, %v1575
        %v1577 = vpop.f32.mrb[0].mxu0
        %1578 = vmatprep.mubr.f32.mxu0 0.0
        %1579 = vmatmul.mubr.f32.gmra.mrb[0].mxu0 %v1262
        %v1580 = vpop.f32.mrb[0].mxu0
        %v1581 = vadd.f32 0.0, %v1580
        %v1582 = vpop.f32.mrb[0].mxu0
        %1583 = vmatprep.mubr.f32.mxu0 0.0
        %1584 = vmatmul.mubr.f32.gmra.mrb[0].mxu0 %v1263
        %v1585 = vpop.f32.mrb[0].mxu0
        %v1586 = vadd.f32 0.0, %v1585
        %v1587 = vpop.f32.mrb[0].mxu0
        %1588 = vmatprep.mubr.f32.mxu0 0.0
        %1589 = vmatmul.mubr.f32.gmra.mrb[0].mxu0 %v1264
        %v1590 = vpop.f32.mrb[0].mxu0
        %v1591 = vadd.f32 0.0, %v1590
        %v1592 = vpop.f32.mrb[0].mxu0
        %1593 = vmatprep.mubr.f32.mxu0 0.0
        %1594 = vmatmul.mubr.f32.gmra.mrb[0].mxu0 %v1265
        %v1595 = vpop.f32.mrb[0].mxu0
        %v1596 = vadd.f32 0.0, %v1595
        %v1597 = vpop.f32.mrb[0].mxu0
        %1598 = vmatprep.mubr.f32.mxu0 0.0
        %1599 = vmatmul.mubr.f32.gmra.mrb[0].mxu0 %v1266
        %v1600 = vpop.f32.mrb[0].mxu0
        %v1601 = vadd.f32 0.0, %v1600
        %v1602 = vpop.f32.mrb[0].mxu0
        %1603 = vmatprep.mubr.f32.mxu0 0.0
        %1604 = vmatmul.mubr.f32.gmra.mrb[0].mxu0 %v1267
        %v1605 = vpop.f32.mrb[0].mxu0
        %v1606 = vadd.f32 0.0, %v1605
        %v1607 = vpop.f32.mrb[0].mxu0
        %1608 = vmatprep.mubr.f32.mxu0 0.0
        %1609 = vmatmul.mubr.f32.gmra.mrb[0].mxu0 %v1268
        %v1610 = vpop.f32.mrb[0].mxu0
        %v1611 = vadd.f32 0.0, %v1610
        %v1612 = vpop.f32.mrb[0].mxu0
        %1613 = vmatprep.mubr.f32.mxu0 0.0
        %1614 = vmatmul.mubr.f32.gmra.mrb[0].mxu0 %v1269
        %v1615 = vpop.f32.mrb[0].mxu0
        %v1616 = vadd.f32 0.0, %v1615
        %v1617 = vpop.f32.mrb[0].mxu0
        %1618 = vmatprep.mubr.f32.mxu0 0.0
        %1619 = vmatmul.mubr.f32.gmra.mrb[0].mxu0 %v1270
        %v1620 = vpop.f32.mrb[0].mxu0
        %v1621 = vadd.f32 0.0, %v1620
        %v1622 = vpop.f32.mrb[0].mxu0
        %1623 = vmatprep.mubr.f32.mxu0 0.0
        %1624 = vmatmul.mubr.f32.gmra.mrb[0].mxu0 %v1271
        %v1625 = vpop.f32.mrb[0].mxu0
        %v1626 = vadd.f32 0.0, %v1625
        %v1627 = vpop.f32.mrb[0].mxu0
        %1628 = vmatprep.mubr.f32.mxu0 0.0
        %1629 = vmatmul.mubr.f32.gmra.mrb[0].mxu0 %v1272
        %v1630 = vpop.f32.mrb[0].mxu0
        %v1631 = vadd.f32 0.0, %v1630
        %v1632 = vpop.f32.mrb[0].mxu0
        %1633 = vmatprep.mubr.f32.mxu0 0.0
        %1634 = vmatmul.mubr.f32.gmra.mrb[0].mxu0 %v1273
        %v1635 = vpop.f32.mrb[0].mxu0
        %v1636 = vadd.f32 0.0, %v1635
        %v1637 = vpop.f32.mrb[0].mxu0
        %1638 = vmatprep.mubr.f32.mxu0 0.0
        %1639 = vmatmul.mubr.f32.gmra.mrb[0].mxu0 %v1274
        %v1640 = vpop.f32.mrb[0].mxu0
        %v1641 = vadd.f32 0.0, %v1640
        %v1642 = vpop.f32.mrb[0].mxu0
        %1643 = vmatprep.mubr.f32.mxu0 0.0
        %1644 = vmatmul.mubr.f32.gmra.mrb[0].mxu0 %v1275
        %v1645 = vpop.f32.mrb[0].mxu0
        %v1646 = vadd.f32 0.0, %v1645
        %v1647 = vpop.f32.mrb[0].mxu0
        %1648 = vmatprep.mubr.f32.mxu0 0.0
        %1649 = vmatmul.mubr.f32.gmra.mrb[0].mxu0 %v1276
        %v1650 = vpop.f32.mrb[0].mxu0
        %v1651 = vadd.f32 0.0, %v1650
        %v1652 = vpop.f32.mrb[0].mxu0
        %1653 = vmatprep.mubr.f32.mxu0 0.0
        %1654 = vmatmul.mubr.f32.gmra.mrb[0].mxu0 %v1277
        %v1655 = vpop.f32.mrb[0].mxu0
        %v1656 = vadd.f32 0.0, %v1655
        %v1657 = vpop.f32.mrb[0].mxu0
        %1658 = vmatprep.mubr.f32.mxu0 0.0
        %1659 = vmatmul.mubr.f32.gmra.mrb[0].mxu0 %v1278
        %v1660 = vpop.f32.mrb[0].mxu0
        %v1661 = vadd.f32 0.0, %v1660
        %v1662 = vpop.f32.mrb[0].mxu0
        %1663 = vmatprep.mubr.f32.mxu0 0.0
        %1664 = vmatmul.mubr.f32.gmra.mrb[0].mxu0 %v448
        %v1665 = vpop.f32.mrb[0].mxu0
        %v1666 = vadd.f32 0.0, %v1665
        %v1667 = vpop.f32.mrb[0].mxu0
        %1668 = vmatprep.mubr.f32.mxu0 0.0
        %1669 = vmatmul.mubr.f32.gmra.mrb[0].mxu0 %v454
        %v1670 = vpop.f32.mrb[0].mxu0
        %v1671 = vadd.f32 0.0, %v1670
        %v1672 = vpop.f32.mrb[0].mxu0
        %1673 = vmatprep.mubr.f32.mxu0 0.0
        %1674 = vmatmul.mubr.f32.gmra.mrb[0].mxu0 %v460
        %v1675 = vpop.f32.mrb[0].mxu0
        %v1676 = vadd.f32 0.0, %v1675
        %v1677 = vpop.f32.mrb[0].mxu0
        %1678 = vmatprep.mubr.f32.mxu0 0.0
        %1679 = vmatmul.mubr.f32.gmra.mrb[0].mxu0 %v466
        %v1680 = vpop.f32.mrb[0].mxu0
        %v1681 = vadd.f32 0.0, %v1680
        %v1682 = vpop.f32.mrb[0].mxu0
        %1683 = vmatprep.mubr.f32.mxu0 0.0
        %1684 = vmatmul.mubr.f32.gmra.mrb[0].mxu0 %v472
        %v1685 = vpop.f32.mrb[0].mxu0
        %v1686 = vadd.f32 0.0, %v1685
        %v1687 = vpop.f32.mrb[0].mxu0
        %1688 = vmatprep.mubr.f32.mxu0 0.0
        %1689 = vmatmul.mubr.f32.gmra.mrb[0].mxu0 %v478
        %v1690 = vpop.f32.mrb[0].mxu0
        %v1691 = vadd.f32 0.0, %v1690
        %v1692 = vpop.f32.mrb[0].mxu0
        %1693 = vmatprep.mubr.f32.mxu0 0.0
        %1694 = vmatmul.mubr.f32.gmra.mrb[0].mxu0 %v484
        %v1695 = vpop.f32.mrb[0].mxu0
        %v1696 = vadd.f32 0.0, %v1695
        %v1697 = vpop.f32.mrb[0].mxu0
        %1698 = vmatprep.mubr.f32.mxu0 0.0
        %1699 = vmatmul.mubr.f32.gmra.mrb[0].mxu0 %v490
        %v1700 = vpop.f32.mrb[0].mxu0
        %v1701 = vadd.f32 0.0, %v1700
        %v1702 = vpop.f32.mrb[0].mxu0
        %1703 = vmatprep.mubr.f32.mxu0 0.0
        %1704 = vmatmul.mubr.f32.gmra.mrb[0].mxu0 %v496
        %v1705 = vpop.f32.mrb[0].mxu0
        %v1706 = vadd.f32 0.0, %v1705
        %v1707 = vpop.f32.mrb[0].mxu0
        %1708 = vmatprep.mubr.f32.mxu0 0.0
        %1709 = vmatmul.mubr.f32.gmra.mrb[0].mxu0 %v502
        %v1710 = vpop.f32.mrb[0].mxu0
        %v1711 = vadd.f32 0.0, %v1710
        %v1712 = vpop.f32.mrb[0].mxu0
        %1713 = vmatprep.mubr.f32.mxu0 0.0
        %1714 = vmatmul.mubr.f32.gmra.mrb[0].mxu0 %v508
        %v1715 = vpop.f32.mrb[0].mxu0
        %v1716 = vadd.f32 0.0, %v1715
        %v1717 = vpop.f32.mrb[0].mxu0
        %1718 = vmatprep.mubr.f32.mxu0 0.0
        %1719 = vmatmul.mubr.f32.gmra.mrb[0].mxu0 %v514
        %v1720 = vpop.f32.mrb[0].mxu0
        %v1721 = vadd.f32 0.0, %v1720
        %v1722 = vpop.f32.mrb[0].mxu0
        %1723 = vmatprep.mubr.f32.mxu0 0.0
        %1724 = vmatmul.mubr.f32.gmra.mrb[0].mxu0 %v520
        %v1725 = vpop.f32.mrb[0].mxu0
        %v1726 = vadd.f32 0.0, %v1725
        %v1727 = vpop.f32.mrb[0].mxu0
        %1728 = vmatprep.mubr.f32.mxu0 0.0
        %1729 = vmatmul.mubr.f32.gmra.mrb[0].mxu0 %v526
        %v1730 = vpop.f32.mrb[0].mxu0
        %v1731 = vadd.f32 0.0, %v1730
        %v1732 = vpop.f32.mrb[0].mxu0
        %1733 = vmatprep.mubr.f32.mxu0 0.0
        %1734 = vmatmul.mubr.f32.gmra.mrb[0].mxu0 %v532
        %v1735 = vpop.f32.mrb[0].mxu0
        %v1736 = vadd.f32 0.0, %v1735
        %v1737 = vpop.f32.mrb[0].mxu0
        %1738 = vmatprep.mubr.f32.mxu0 0.0
        %1739 = vmatmul.mubr.f32.gmra.mrb[0].mxu0 %v538
        %v1740 = vpop.f32.mrb[0].mxu0
        %v1741 = vadd.f32 0.0, %v1740
        %v1742 = vpop.f32.mrb[0].mxu0
        %1743 = vmatprep.mubr.f32.mxu0 0.0
        %1744 = vmatmul.mubr.f32.gmra.mrb[0].mxu0 %v544
        %v1745 = vpop.f32.mrb[0].mxu0
        %v1746 = vadd.f32 0.0, %v1745
        %v1747 = vpop.f32.mrb[0].mxu0
        %1748 = vmatprep.mubr.f32.mxu0 0.0
        %1749 = vmatmul.mubr.f32.gmra.mrb[0].mxu0 %v550
        %v1750 = vpop.f32.mrb[0].mxu0
        %v1751 = vadd.f32 0.0, %v1750
        %v1752 = vpop.f32.mrb[0].mxu0
        %1753 = vmatprep.mubr.f32.mxu0 0.0
        %1754 = vmatmul.mubr.f32.gmra.mrb[0].mxu0 %v556
        %v1755 = vpop.f32.mrb[0].mxu0
        %v1756 = vadd.f32 0.0, %v1755
        %v1757 = vpop.f32.mrb[0].mxu0
        %1758 = vmatprep.mubr.f32.mxu0 0.0
        %1759 = vmatmul.mubr.f32.gmra.mrb[0].mxu0 %v562
        %v1760 = vpop.f32.mrb[0].mxu0
        %v1761 = vadd.f32 0.0, %v1760
        %v1762 = vpop.f32.mrb[0].mxu0
        %1763 = vmatprep.mubr.f32.mxu0 0.0
        %1764 = vmatmul.mubr.f32.gmra.mrb[0].mxu0 %v568
        %v1765 = vpop.f32.mrb[0].mxu0
        %v1766 = vadd.f32 0.0, %v1765
        %v1767 = vpop.f32.mrb[0].mxu0
        %1768 = vmatprep.mubr.f32.mxu0 0.0
        %1769 = vmatmul.mubr.f32.gmra.mrb[0].mxu0 %v574
        %v1770 = vpop.f32.mrb[0].mxu0
        %v1771 = vadd.f32 0.0, %v1770
        %v1772 = vpop.f32.mrb[0].mxu0
        %1773 = vmatprep.mubr.f32.mxu0 0.0
        %1774 = vmatmul.mubr.f32.gmra.mrb[0].mxu0 %v580
        %v1775 = vpop.f32.mrb[0].mxu0
        %v1776 = vadd.f32 0.0, %v1775
        %v1777 = vpop.f32.mrb[0].mxu0
        %1778 = vmatprep.mubr.f32.mxu0 0.0
        %1779 = vmatmul.mubr.f32.gmra.mrb[0].mxu0 %v586
        %v1780 = vpop.f32.mrb[0].mxu0
        %v1781 = vadd.f32 0.0, %v1780
        %v1782 = vpop.f32.mrb[0].mxu0
        %1783 = vmatprep.mubr.f32.mxu0 0.0
        %1784 = vmatmul.mubr.f32.gmra.mrb[0].mxu0 %v592
        %v1785 = vpop.f32.mrb[0].mxu0
        %v1786 = vadd.f32 0.0, %v1785
        %v1787 = vpop.f32.mrb[0].mxu0
        %1788 = vmatprep.mubr.f32.mxu0 0.0
        %1789 = vmatmul.mubr.f32.gmra.mrb[0].mxu0 %v598
        %v1790 = vpop.f32.mrb[0].mxu0
        %v1791 = vadd.f32 0.0, %v1790
        %v1792 = vpop.f32.mrb[0].mxu0
        %1793 = vmatprep.mubr.f32.mxu0 0.0
        %1794 = vmatmul.mubr.f32.gmra.mrb[0].mxu0 %v604
        %v1795 = vpop.f32.mrb[0].mxu0
        %v1796 = vadd.f32 0.0, %v1795
        %v1797 = vpop.f32.mrb[0].mxu0
        %1798 = vmatprep.mubr.f32.mxu0 0.0
        %1799 = vmatmul.mubr.f32.gmra.mrb[0].mxu0 %v610
        %v1800 = vpop.f32.mrb[0].mxu0
        %v1801 = vadd.f32 0.0, %v1800
        %v1802 = vpop.f32.mrb[0].mxu0
        %1803 = vmatprep.mubr.f32.mxu0 0.0
        %1804 = vmatmul.mubr.f32.gmra.mrb[0].mxu0 %v616
        %v1805 = vpop.f32.mrb[0].mxu0
        %v1806 = vadd.f32 0.0, %v1805
        %v1807 = vpop.f32.mrb[0].mxu0
        %1808 = vmatprep.mubr.f32.mxu0 0.0
        %1809 = vmatmul.mubr.f32.gmra.mrb[0].mxu0 %v622
        %v1810 = vpop.f32.mrb[0].mxu0
        %v1811 = vadd.f32 0.0, %v1810
        %v1812 = vpop.f32.mrb[0].mxu0
        %1813 = vmatprep.mubr.f32.mxu0 0.0
        %1814 = vmatmul.mubr.f32.gmra.mrb[0].mxu0 %v628
        %v1815 = vpop.f32.mrb[0].mxu0
        %v1816 = vadd.f32 0.0, %v1815
        %v1817 = vpop.f32.mrb[0].mxu0
        %1818 = vmatprep.mubr.f32.mxu0 0.0
        %1819 = vmatmul.mubr.f32.gmra.mrb[0].mxu0 %v634
        %v1820 = vpop.f32.mrb[0].mxu0
        %v1821 = vadd.f32 0.0, %v1820
        %v1822 = vpop.f32.mrb[0].mxu0
        %1823 = vdwg.mxu0
        %v1824 = vsub.f32 %v450, %v1346
        %v1825 = vsub.f32 %v456, %v1351
        %v1826 = vsub.f32 %v462, %v1356
        %v1827 = vsub.f32 %v468, %v1361
        %v1828 = vsub.f32 %v474, %v1366
        %v1829 = vsub.f32 %v480, %v1371
        %v1830 = vsub.f32 %v486, %v1376
        %v1831 = vsub.f32 %v492, %v1381
        %v1832 = vsub.f32 %v498, %v1386
        %v1833 = vsub.f32 %v504, %v1391
        %v1834 = vsub.f32 %v510, %v1396
        %v1835 = vsub.f32 %v516, %v1401
        %v1836 = vsub.f32 %v522, %v1406
        %v1837 = vsub.f32 %v528, %v1411
        %v1838 = vsub.f32 %v534, %v1416
        %v1839 = vsub.f32 %v540, %v1421
        %v1840 = vsub.f32 %v546, %v1426
        %v1841 = vsub.f32 %v552, %v1431
        %v1842 = vsub.f32 %v558, %v1436
        %v1843 = vsub.f32 %v564, %v1441
        %v1844 = vsub.f32 %v570, %v1446
        %v1845 = vsub.f32 %v576, %v1451
        %v1846 = vsub.f32 %v582, %v1456
        %v1847 = vsub.f32 %v588, %v1461
        %v1848 = vsub.f32 %v594, %v1466
        %v1849 = vsub.f32 %v600, %v1471
        %v1850 = vsub.f32 %v606, %v1476
        %v1851 = vsub.f32 %v612, %v1481
        %v1852 = vsub.f32 %v618, %v1486
        %v1853 = vsub.f32 %v624, %v1491
        %v1854 = vsub.f32 %v630, %v1496
        %v1855 = vsub.f32 %v636, %v1501
        %v1856 = vmul.f32 %v1824, %v1506
        %v1857 = vmul.f32 %v1825, %v1511
        %v1858 = vmul.f32 %v1826, %v1516
        %v1859 = vmul.f32 %v1827, %v1521
        %v1860 = vmul.f32 %v1828, %v1526
        %v1861 = vmul.f32 %v1829, %v1531
        %v1862 = vmul.f32 %v1830, %v1536
        %v1863 = vmul.f32 %v1831, %v1541
        %v1864 = vmul.f32 %v1832, %v1546
        %v1865 = vmul.f32 %v1833, %v1551
        %v1866 = vmul.f32 %v1834, %v1556
        %v1867 = vmul.f32 %v1835, %v1561
        %v1868 = vmul.f32 %v1836, %v1566
        %v1869 = vmul.f32 %v1837, %v1571
        %v1870 = vmul.f32 %v1838, %v1576
        %v1871 = vmul.f32 %v1839, %v1581
        %v1872 = vmul.f32 %v1840, %v1586
        %v1873 = vmul.f32 %v1841, %v1591
        %v1874 = vmul.f32 %v1842, %v1596
        %v1875 = vmul.f32 %v1843, %v1601
        %v1876 = vmul.f32 %v1844, %v1606
        %v1877 = vmul.f32 %v1845, %v1611
        %v1878 = vmul.f32 %v1846, %v1616
        %v1879 = vmul.f32 %v1847, %v1621
        %v1880 = vmul.f32 %v1848, %v1626
        %v1881 = vmul.f32 %v1849, %v1631
        %v1882 = vmul.f32 %v1850, %v1636
        %v1883 = vmul.f32 %v1851, %v1641
        %v1884 = vmul.f32 %v1852, %v1646
        %v1885 = vmul.f32 %v1853, %v1651
        %v1886 = vmul.f32 %v1854, %v1656
        %v1887 = vmul.f32 %v1855, %v1661
        %v1888 = vmax.f32 %v1856, 0.0
        %v1889 = vmax.f32 %v1857, 0.0
        %v1890 = vmax.f32 %v1858, 0.0
        %v1891 = vmax.f32 %v1859, 0.0
        %v1892 = vmax.f32 %v1860, 0.0
        %v1893 = vmax.f32 %v1861, 0.0
        %v1894 = vmax.f32 %v1862, 0.0
        %v1895 = vmax.f32 %v1863, 0.0
        %v1896 = vmax.f32 %v1864, 0.0
        %v1897 = vmax.f32 %v1865, 0.0
        %v1898 = vmax.f32 %v1866, 0.0
        %v1899 = vmax.f32 %v1867, 0.0
        %v1900 = vmax.f32 %v1868, 0.0
        %v1901 = vmax.f32 %v1869, 0.0
        %v1902 = vmax.f32 %v1870, 0.0
        %v1903 = vmax.f32 %v1871, 0.0
        %v1904 = vmax.f32 %v1872, 0.0
        %v1905 = vmax.f32 %v1873, 0.0
        %v1906 = vmax.f32 %v1874, 0.0
        %v1907 = vmax.f32 %v1875, 0.0
        %v1908 = vmax.f32 %v1876, 0.0
        %v1909 = vmax.f32 %v1877, 0.0
        %v1910 = vmax.f32 %v1878, 0.0
        %v1911 = vmax.f32 %v1879, 0.0
        %v1912 = vmax.f32 %v1880, 0.0
        %v1913 = vmax.f32 %v1881, 0.0
        %v1914 = vmax.f32 %v1882, 0.0
        %v1915 = vmax.f32 %v1883, 0.0
        %v1916 = vmax.f32 %v1884, 0.0
        %v1917 = vmax.f32 %v1885, 0.0
        %v1918 = vmax.f32 %v1886, 0.0
        %v1919 = vmax.f32 %v1887, 0.0
        %v1920 = vmul.f32 %v1888, %v1666
        %v1921 = vmul.f32 %v1889, %v1671
        %v1922 = vmul.f32 %v1890, %v1676
        %v1923 = vmul.f32 %v1891, %v1681
        %v1924 = vmul.f32 %v1892, %v1686
        %v1925 = vmul.f32 %v1893, %v1691
        %v1926 = vmul.f32 %v1894, %v1696
        %v1927 = vmul.f32 %v1895, %v1701
        %v1928 = vmul.f32 %v1896, %v1706
        %v1929 = vmul.f32 %v1897, %v1711
        %v1930 = vmul.f32 %v1898, %v1716
        %v1931 = vmul.f32 %v1899, %v1721
        %v1932 = vmul.f32 %v1900, %v1726
        %v1933 = vmul.f32 %v1901, %v1731
        %v1934 = vmul.f32 %v1902, %v1736
        %v1935 = vmul.f32 %v1903, %v1741
        %v1936 = vmul.f32 %v1904, %v1746
        %v1937 = vmul.f32 %v1905, %v1751
        %v1938 = vmul.f32 %v1906, %v1756
        %v1939 = vmul.f32 %v1907, %v1761
        %v1940 = vmul.f32 %v1908, %v1766
        %v1941 = vmul.f32 %v1909, %v1771
        %v1942 = vmul.f32 %v1910, %v1776
        %v1943 = vmul.f32 %v1911, %v1781
        %v1944 = vmul.f32 %v1912, %v1786
        %v1945 = vmul.f32 %v1913, %v1791
        %v1946 = vmul.f32 %v1914, %v1796
        %v1947 = vmul.f32 %v1915, %v1801
        %v1948 = vmul.f32 %v1916, %v1806
        %v1949 = vmul.f32 %v1917, %v1811
        %v1950 = vmul.f32 %v1918, %v1816
        %v1951 = vmul.f32 %v1919, %v1821
        %v1952 = vld [vmem:[#allocation7] sm:$0xff]
        %v1953 = vld [vmem:[#allocation7 + $0x8] sm:$0xff]
        %v1954 = vld [vmem:[#allocation7 + $0x10] sm:$0xff]
        %v1955 = vld [vmem:[#allocation7 + $0x18] sm:$0xff]
        %v1956 = vld [vmem:[#allocation7 + $0x20] sm:$0xff]
        %v1957 = vld [vmem:[#allocation7 + $0x28] sm:$0xff]
        %v1958 = vld [vmem:[#allocation7 + $0x30] sm:$0xff]
        %v1959 = vld [vmem:[#allocation7 + $0x38] sm:$0xff]
        %v1960 = vld [vmem:[#allocation7 + $0x40] sm:$0xff]
        %v1961 = vld [vmem:[#allocation7 + $0x48] sm:$0xff]
        %v1962 = vld [vmem:[#allocation7 + $0x50] sm:$0xff]
        %v1963 = vld [vmem:[#allocation7 + $0x58] sm:$0xff]
        %v1964 = vld [vmem:[#allocation7 + $0x60] sm:$0xff]
        %v1965 = vld [vmem:[#allocation7 + $0x68] sm:$0xff]
        %v1966 = vld [vmem:[#allocation7 + $0x70] sm:$0xff]
        %v1967 = vld [vmem:[#allocation7 + $0x78] sm:$0xff]
        %v1968 = vld [vmem:[#allocation7 + $0x80] sm:$0xff]
        %v1969 = vld [vmem:[#allocation7 + $0x88] sm:$0xff]
        %v1970 = vld [vmem:[#allocation7 + $0x90] sm:$0xff]
        %v1971 = vld [vmem:[#allocation7 + $0x98] sm:$0xff]
        %v1972 = vld [vmem:[#allocation7 + $0xa0] sm:$0xff]
        %v1973 = vld [vmem:[#allocation7 + $0xa8] sm:$0xff]
        %v1974 = vld [vmem:[#allocation7 + $0xb0] sm:$0xff]
        %v1975 = vld [vmem:[#allocation7 + $0xb8] sm:$0xff]
        %v1976 = vld [vmem:[#allocation7 + $0xc0] sm:$0xff]
        %v1977 = vld [vmem:[#allocation7 + $0xc8] sm:$0xff]
        %v1978 = vld [vmem:[#allocation7 + $0xd0] sm:$0xff]
        %v1979 = vld [vmem:[#allocation7 + $0xd8] sm:$0xff]
        %v1980 = vld [vmem:[#allocation7 + $0xe0] sm:$0xff]
        %v1981 = vld [vmem:[#allocation7 + $0xe8] sm:$0xff]
        %v1982 = vld [vmem:[#allocation7 + $0xf0] sm:$0xff]
        %v1983 = vld [vmem:[#allocation7 + $0xf8] sm:$0xff]
        %1984 = vmatprep.subr.mxu0 0.0
        %1985 = vmatpush1.msra.mxu0 %v1952
        %1986 = vmatprep.subr.mxu0 0.0
        %1987 = vmatpush1.msra.mxu0 %v1953
        %1988 = vmatprep.subr.mxu0 0.0
        %1989 = vmatpush1.msra.mxu0 %v1954
        %1990 = vmatprep.subr.mxu0 0.0
        %1991 = vmatpush1.msra.mxu0 %v1955
        %1992 = vmatprep.subr.mxu0 0.0
        %1993 = vmatpush1.msra.mxu0 %v1956
        %1994 = vmatprep.subr.mxu0 0.0
        %1995 = vmatpush1.msra.mxu0 %v1957
        %1996 = vmatprep.subr.mxu0 0.0
        %1997 = vmatpush1.msra.mxu0 %v1958
        %1998 = vmatprep.subr.mxu0 0.0
        %1999 = vmatpush1.msra.mxu0 %v1959
        %2000 = vmatprep.subr.mxu0 0.0
        %2001 = vmatpush1.msra.mxu0 %v1960
        %2002 = vmatprep.subr.mxu0 0.0
        %2003 = vmatpush1.msra.mxu0 %v1961
        %2004 = vmatprep.subr.mxu0 0.0
        %2005 = vmatpush1.msra.mxu0 %v1962
        %2006 = vmatprep.subr.mxu0 0.0
        %2007 = vmatpush1.msra.mxu0 %v1963
        %2008 = vmatprep.subr.mxu0 0.0
        %2009 = vmatpush1.msra.mxu0 %v1964
        %2010 = vmatprep.subr.mxu0 0.0
        %2011 = vmatpush1.msra.mxu0 %v1965
        %2012 = vmatprep.subr.mxu0 0.0
        %2013 = vmatpush1.msra.mxu0 %v1966
        %2014 = vmatprep.subr.mxu0 0.0
        %2015 = vmatpush1.msra.mxu0 %v1967
        %2016 = vmatprep.subr.mxu0 0.0
        %2017 = vmatpush1.msra.mxu0 %v1968
        %2018 = vmatprep.subr.mxu0 0.0
        %2019 = vmatpush1.msra.mxu0 %v1969
        %2020 = vmatprep.subr.mxu0 0.0
        %2021 = vmatpush1.msra.mxu0 %v1970
        %2022 = vmatprep.subr.mxu0 0.0
        %2023 = vmatpush1.msra.mxu0 %v1971
        %2024 = vmatprep.subr.mxu0 0.0
        %2025 = vmatpush1.msra.mxu0 %v1972
        %2026 = vmatprep.subr.mxu0 0.0
        %2027 = vmatpush1.msra.mxu0 %v1973
        %2028 = vmatprep.subr.mxu0 0.0
        %2029 = vmatpush1.msra.mxu0 %v1974
        %2030 = vmatprep.subr.mxu0 0.0
        %2031 = vmatpush1.msra.mxu0 %v1975
        %2032 = vmatprep.subr.mxu0 0.0
        %2033 = vmatpush1.msra.mxu0 %v1976
        %2034 = vmatprep.subr.mxu0 0.0
        %2035 = vmatpush1.msra.mxu0 %v1977
        %2036 = vmatprep.subr.mxu0 0.0
        %2037 = vmatpush1.msra.mxu0 %v1978
        %2038 = vmatprep.subr.mxu0 0.0
        %2039 = vmatpush1.msra.mxu0 %v1979
        %2040 = vmatprep.subr.mxu0 0.0
        %2041 = vmatpush1.msra.mxu0 %v1980
        %2042 = vmatprep.subr.mxu0 0.0
        %2043 = vmatpush1.msra.mxu0 %v1981
        %2044 = vmatprep.subr.mxu0 0.0
        %2045 = vmatpush1.msra.mxu0 %v1982
        %2046 = vmatprep.subr.mxu0 0.0
        %2047 = vmatpush1.msra.mxu0 %v1983
        %2048 = vmatprep.mubr.f32.mxu0 %v448
        %2049 = vmatmul.mubr.f32.gmra.mrb[0].mxu0 %v1920
        %v2050 = vpop.f32.mrb[0].mxu0
        %v2051 = vadd.f32 0.0, %v2050
        %v2052 = vpop.f32.mrb[0].mxu0
        %2053 = vmatprep.mubr.f32.mxu0 %v454
        %2054 = vmatmul.mubr.f32.gmra.mrb[0].mxu0 %v1921
        %v2055 = vpop.f32.mrb[0].mxu0
        %v2056 = vadd.f32 0.0, %v2055
        %v2057 = vpop.f32.mrb[0].mxu0
        %2058 = vmatprep.mubr.f32.mxu0 %v460
        %2059 = vmatmul.mubr.f32.gmra.mrb[0].mxu0 %v1922
        %v2060 = vpop.f32.mrb[0].mxu0
        %v2061 = vadd.f32 0.0, %v2060
        %v2062 = vpop.f32.mrb[0].mxu0
        %2063 = vmatprep.mubr.f32.mxu0 %v466
        %2064 = vmatmul.mubr.f32.gmra.mrb[0].mxu0 %v1923
        %v2065 = vpop.f32.mrb[0].mxu0
        %v2066 = vadd.f32 0.0, %v2065
        %v2067 = vpop.f32.mrb[0].mxu0
        %2068 = vmatprep.mubr.f32.mxu0 %v472
        %2069 = vmatmul.mubr.f32.gmra.mrb[0].mxu0 %v1924
        %v2070 = vpop.f32.mrb[0].mxu0
        %v2071 = vadd.f32 0.0, %v2070
        %v2072 = vpop.f32.mrb[0].mxu0
        %2073 = vmatprep.mubr.f32.mxu0 %v478
        %2074 = vmatmul.mubr.f32.gmra.mrb[0].mxu0 %v1925
        %v2075 = vpop.f32.mrb[0].mxu0
        %v2076 = vadd.f32 0.0, %v2075
        %v2077 = vpop.f32.mrb[0].mxu0
        %2078 = vmatprep.mubr.f32.mxu0 %v484
        %2079 = vmatmul.mubr.f32.gmra.mrb[0].mxu0 %v1926
        %v2080 = vpop.f32.mrb[0].mxu0
        %v2081 = vadd.f32 0.0, %v2080
        %v2082 = vpop.f32.mrb[0].mxu0
        %2083 = vmatprep.mubr.f32.mxu0 %v490
        %2084 = vmatmul.mubr.f32.gmra.mrb[0].mxu0 %v1927
        %v2085 = vpop.f32.mrb[0].mxu0
        %v2086 = vadd.f32 0.0, %v2085
        %v2087 = vpop.f32.mrb[0].mxu0
        %2088 = vmatprep.mubr.f32.mxu0 %v496
        %2089 = vmatmul.mubr.f32.gmra.mrb[0].mxu0 %v1928
        %v2090 = vpop.f32.mrb[0].mxu0
        %v2091 = vadd.f32 0.0, %v2090
        %v2092 = vpop.f32.mrb[0].mxu0
        %2093 = vmatprep.mubr.f32.mxu0 %v502
        %2094 = vmatmul.mubr.f32.gmra.mrb[0].mxu0 %v1929
        %v2095 = vpop.f32.mrb[0].mxu0
        %v2096 = vadd.f32 0.0, %v2095
        %v2097 = vpop.f32.mrb[0].mxu0
        %2098 = vmatprep.mubr.f32.mxu0 %v508
        %2099 = vmatmul.mubr.f32.gmra.mrb[0].mxu0 %v1930
        %v2100 = vpop.f32.mrb[0].mxu0
        %v2101 = vadd.f32 0.0, %v2100
        %v2102 = vpop.f32.mrb[0].mxu0
        %2103 = vmatprep.mubr.f32.mxu0 %v514
        %2104 = vmatmul.mubr.f32.gmra.mrb[0].mxu0 %v1931
        %v2105 = vpop.f32.mrb[0].mxu0
        %v2106 = vadd.f32 0.0, %v2105
        %v2107 = vpop.f32.mrb[0].mxu0
        %2108 = vmatprep.mubr.f32.mxu0 %v520
        %2109 = vmatmul.mubr.f32.gmra.mrb[0].mxu0 %v1932
        %v2110 = vpop.f32.mrb[0].mxu0
        %v2111 = vadd.f32 0.0, %v2110
        %v2112 = vpop.f32.mrb[0].mxu0
        %2113 = vmatprep.mubr.f32.mxu0 %v526
        %2114 = vmatmul.mubr.f32.gmra.mrb[0].mxu0 %v1933
        %v2115 = vpop.f32.mrb[0].mxu0
        %v2116 = vadd.f32 0.0, %v2115
        %v2117 = vpop.f32.mrb[0].mxu0
        %2118 = vmatprep.mubr.f32.mxu0 %v532
        %2119 = vmatmul.mubr.f32.gmra.mrb[0].mxu0 %v1934
        %v2120 = vpop.f32.mrb[0].mxu0
        %v2121 = vadd.f32 0.0, %v2120
        %v2122 = vpop.f32.mrb[0].mxu0
        %2123 = vmatprep.mubr.f32.mxu0 %v538
        %2124 = vmatmul.mubr.f32.gmra.mrb[0].mxu0 %v1935
        %v2125 = vpop.f32.mrb[0].mxu0
        %v2126 = vadd.f32 0.0, %v2125
        %v2127 = vpop.f32.mrb[0].mxu0
        %2128 = vmatprep.mubr.f32.mxu0 %v544
        %2129 = vmatmul.mubr.f32.gmra.mrb[0].mxu0 %v1936
        %v2130 = vpop.f32.mrb[0].mxu0
        %v2131 = vadd.f32 0.0, %v2130
        %v2132 = vpop.f32.mrb[0].mxu0
        %2133 = vmatprep.mubr.f32.mxu0 %v550
        %2134 = vmatmul.mubr.f32.gmra.mrb[0].mxu0 %v1937
        %v2135 = vpop.f32.mrb[0].mxu0
        %v2136 = vadd.f32 0.0, %v2135
        %v2137 = vpop.f32.mrb[0].mxu0
        %2138 = vmatprep.mubr.f32.mxu0 %v556
        %2139 = vmatmul.mubr.f32.gmra.mrb[0].mxu0 %v1938
        %v2140 = vpop.f32.mrb[0].mxu0
        %v2141 = vadd.f32 0.0, %v2140
        %v2142 = vpop.f32.mrb[0].mxu0
        %2143 = vmatprep.mubr.f32.mxu0 %v562
        %2144 = vmatmul.mubr.f32.gmra.mrb[0].mxu0 %v1939
        %v2145 = vpop.f32.mrb[0].mxu0
        %v2146 = vadd.f32 0.0, %v2145
        %v2147 = vpop.f32.mrb[0].mxu0
        %2148 = vmatprep.mubr.f32.mxu0 %v568
        %2149 = vmatmul.mubr.f32.gmra.mrb[0].mxu0 %v1940
        %v2150 = vpop.f32.mrb[0].mxu0
        %v2151 = vadd.f32 0.0, %v2150
        %v2152 = vpop.f32.mrb[0].mxu0
        %2153 = vmatprep.mubr.f32.mxu0 %v574
        %2154 = vmatmul.mubr.f32.gmra.mrb[0].mxu0 %v1941
        %v2155 = vpop.f32.mrb[0].mxu0
        %v2156 = vadd.f32 0.0, %v2155
        %v2157 = vpop.f32.mrb[0].mxu0
        %2158 = vmatprep.mubr.f32.mxu0 %v580
        %2159 = vmatmul.mubr.f32.gmra.mrb[0].mxu0 %v1942
        %v2160 = vpop.f32.mrb[0].mxu0
        %v2161 = vadd.f32 0.0, %v2160
        %v2162 = vpop.f32.mrb[0].mxu0
        %2163 = vmatprep.mubr.f32.mxu0 %v586
        %2164 = vmatmul.mubr.f32.gmra.mrb[0].mxu0 %v1943
        %v2165 = vpop.f32.mrb[0].mxu0
        %v2166 = vadd.f32 0.0, %v2165
        %v2167 = vpop.f32.mrb[0].mxu0
        %2168 = vmatprep.mubr.f32.mxu0 %v592
        %2169 = vmatmul.mubr.f32.gmra.mrb[0].mxu0 %v1944
        %v2170 = vpop.f32.mrb[0].mxu0
        %v2171 = vadd.f32 0.0, %v2170
        %v2172 = vpop.f32.mrb[0].mxu0
        %2173 = vmatprep.mubr.f32.mxu0 %v598
        %2174 = vmatmul.mubr.f32.gmra.mrb[0].mxu0 %v1945
        %v2175 = vpop.f32.mrb[0].mxu0
        %v2176 = vadd.f32 0.0, %v2175
        %v2177 = vpop.f32.mrb[0].mxu0
        %2178 = vmatprep.mubr.f32.mxu0 %v604
        %2179 = vmatmul.mubr.f32.gmra.mrb[0].mxu0 %v1946
        %v2180 = vpop.f32.mrb[0].mxu0
        %v2181 = vadd.f32 0.0, %v2180
        %v2182 = vpop.f32.mrb[0].mxu0
        %2183 = vmatprep.mubr.f32.mxu0 %v610
        %2184 = vmatmul.mubr.f32.gmra.mrb[0].mxu0 %v1947
        %v2185 = vpop.f32.mrb[0].mxu0
        %v2186 = vadd.f32 0.0, %v2185
        %v2187 = vpop.f32.mrb[0].mxu0
        %2188 = vmatprep.mubr.f32.mxu0 %v616
        %2189 = vmatmul.mubr.f32.gmra.mrb[0].mxu0 %v1948
        %v2190 = vpop.f32.mrb[0].mxu0
        %v2191 = vadd.f32 0.0, %v2190
        %v2192 = vpop.f32.mrb[0].mxu0
        %2193 = vmatprep.mubr.f32.mxu0 %v622
        %2194 = vmatmul.mubr.f32.gmra.mrb[0].mxu0 %v1949
        %v2195 = vpop.f32.mrb[0].mxu0
        %v2196 = vadd.f32 0.0, %v2195
        %v2197 = vpop.f32.mrb[0].mxu0
        %2198 = vmatprep.mubr.f32.mxu0 %v628
        %2199 = vmatmul.mubr.f32.gmra.mrb[0].mxu0 %v1950
        %v2200 = vpop.f32.mrb[0].mxu0
        %v2201 = vadd.f32 0.0, %v2200
        %v2202 = vpop.f32.mrb[0].mxu0
        %2203 = vmatprep.mubr.f32.mxu0 %v634
        %2204 = vmatmul.mubr.f32.gmra.mrb[0].mxu0 %v1951
        %v2205 = vpop.f32.mrb[0].mxu0
        %v2206 = vadd.f32 0.0, %v2205
        %v2207 = vpop.f32.mrb[0].mxu0
        %2208 = vdwg.mxu0
        %2209 = vst [vmem:[%s286] sm:$0xff] %v2051
        %2210 = vst [vmem:[%s286 + $0x8] sm:$0xff] %v2056
        %2211 = vst [vmem:[%s286 + $0x10] sm:$0xff] %v2061
        %2212 = vst [vmem:[%s286 + $0x18] sm:$0xff] %v2066
        %2213 = vst [vmem:[%s286 + $0x20] sm:$0xff] %v2071
        %2214 = vst [vmem:[%s286 + $0x28] sm:$0xff] %v2076
        %2215 = vst [vmem:[%s286 + $0x30] sm:$0xff] %v2081
        %2216 = vst [vmem:[%s286 + $0x38] sm:$0xff] %v2086
        %2217 = vst [vmem:[%s286 + $0x40] sm:$0xff] %v2091
        %2218 = vst [vmem:[%s286 + $0x48] sm:$0xff] %v2096
        %2219 = vst [vmem:[%s286 + $0x50] sm:$0xff] %v2101
        %2220 = vst [vmem:[%s286 + $0x58] sm:$0xff] %v2106
        %2221 = vst [vmem:[%s286 + $0x60] sm:$0xff] %v2111
        %2222 = vst [vmem:[%s286 + $0x68] sm:$0xff] %v2116
        %2223 = vst [vmem:[%s286 + $0x70] sm:$0xff] %v2121
        %2224 = vst [vmem:[%s286 + $0x78] sm:$0xff] %v2126
        %2225 = vst [vmem:[%s286 + $0x80] sm:$0xff] %v2131
        %2226 = vst [vmem:[%s286 + $0x88] sm:$0xff] %v2136
        %2227 = vst [vmem:[%s286 + $0x90] sm:$0xff] %v2141
        %2228 = vst [vmem:[%s286 + $0x98] sm:$0xff] %v2146
        %2229 = vst [vmem:[%s286 + $0xa0] sm:$0xff] %v2151
        %2230 = vst [vmem:[%s286 + $0xa8] sm:$0xff] %v2156
        %2231 = vst [vmem:[%s286 + $0xb0] sm:$0xff] %v2161
        %2232 = vst [vmem:[%s286 + $0xb8] sm:$0xff] %v2166
        %2233 = vst [vmem:[%s286 + $0xc0] sm:$0xff] %v2171
        %2234 = vst [vmem:[%s286 + $0xc8] sm:$0xff] %v2176
        %2235 = vst [vmem:[%s286 + $0xd0] sm:$0xff] %v2181
        %2236 = vst [vmem:[%s286 + $0xd8] sm:$0xff] %v2186
        %2237 = vst [vmem:[%s286 + $0xe0] sm:$0xff] %v2191
        %2238 = vst [vmem:[%s286 + $0xe8] sm:$0xff] %v2196
        %2239 = vst [vmem:[%s286 + $0xf0] sm:$0xff] %v2201
        %2240 = vst [vmem:[%s286 + $0xf8] sm:$0xff] %v2206
        %s2241 = sand.u32 %s142, 1
        %s2242 = scalar_lea.sflag [#allocation4], %s2241
        %s2243 = sand.u32 %s142, 1
        %s2244 = smul.addr %s2243, 256
        %s2245 = scalar_lea.vmem [#allocation10], %s2244
        // Predicated region
        $region57: #{tpu_custom_call.1} parent=39 // pred_check
          %p2246 = pneg %p152
        $region58: #{tpu_custom_call.1} parent=39 // pred_check_branch
          %2248 = sbr.rel (%p2246) target = $region60
        $region59: #{tpu_custom_call.1} parent=39 // pred_region
          %s2249 = smul.u32 32, %s24
          %s2251 = ssub.s32 4096, 4096
          %2252 = vsyncadd %s2242, %s2251
          %s2253 = smul.addr %s2249, 128
          %s2254 = scalar_lea.hbm %s5, %s2253
          %s2255 = sshll.u32 %s2245, 4
          %s2256 = int_to_ptr.vmem [resolvable:$true] %s2255
          %2261 = dma.vmem_to_hbm [thread:$0]  %s2256, 4096, %s2254, %s2242, 128, 128, 8
        $region60: #{tpu_custom_call.1} parent=39 // pred_fallthru
          _
      $region40: #{tpu_custom_call.1} parent=5 // pred_fallthru
        _
      %p2262 = scmp.le.s32.totalorder 2, %s19
      // Predicated region
      $region61: #{tpu_custom_call.1} parent=5 // pred_check
        %p2263 = pneg %p2262
      $region62: #{tpu_custom_call.1} parent=5 // pred_check_branch
        %2265 = sbr.rel (%p2263) target = $region64
      $region63: #{tpu_custom_call.1} parent=5 // pred_region
        %s2266 = ssub.s32 %s19, 2
        // Predicated region
        $region65: #{tpu_custom_call.1} parent=63 // pred_check
          %p2267 = pneg %p158
        $region66: #{tpu_custom_call.1} parent=63 // pred_check_branch
          %2269 = sbr.rel (%p2267) target = $region68
        $region67: #{tpu_custom_call.1} parent=63 // pred_region
          %s2270 = sand.u32 %s143, 1
          %s2271 = scalar_lea.sflag [#allocation4], %s2270
          %s2272 = sand.u32 %s143, 1
          %s2273 = smul.addr %s2272, 256
          %s2274 = scalar_lea.vmem [#allocation10], %s2273
          %2275 = dma.done %s2271, 4096
        $region68: #{tpu_custom_call.1} parent=63 // pred_fallthru
          _
      $region64: #{tpu_custom_call.1} parent=5 // pred_fallthru
        _
    $region6: #{tpu_custom_call.1} parent=1 // loop_footer
      %s23 = sadd.s32 1, %s19
    $region7: #{tpu_custom_call.1} parent=1 // loop_footer_branch
      %18 = sbr.rel target = $region3
    $region8: #{tpu_custom_call.1} parent=1 // loop_exit
      _
    %2276 = vsyncpa [#allocation3], 1
    %s2277 = scalar_lea.sflag [#allocation3], 1
    %2278 = vsyncpa %s2277, 1
    %2279 = vsyncpa [#allocation6], 1
    %2280 = vsyncpa [#allocation9], 1
    %2281 = vsyncpa [#allocation4], 1
    %s2282 = scalar_lea.sflag [#allocation4], 1
    %2283 = vsyncpa %s2282, 1

</llo_original>
